<compile_context>
chip_gen: v7x
topology: tpu7x:2x2x1
jax: 0.10.0
libtpu: 0.0.40
codegen_flags: <defaults>
</compile_context>

<pallas_src>
import jax
import jax.numpy as jnp
from jax.experimental import pallas as pl
from jax.experimental.pallas import tpu as pltpu


def _round_up(x, m):
    return (x + m - 1) // m * m


def _pick_block(total, candidates):
    """Largest candidate that evenly divides `total`, else the full extent."""
    for c in candidates:
        if total > c and total % c == 0:
            return c
    return total


def _pair_classifier_kernel(s1_ref, s2_ref, m1_ref, m2_ref,
                            inv1_ref, inv2_ref,
                            w1a_ref, w1b_ref, w1c_ref, w1d_ref, b1_ref,
                            w2_ref, b2_ref,
                            out_ref,
                            acc1_ref, acc2_ref):
    """Streamed masked-mean pooling + pair features + MLP classifier."""
    k = pl.program_id(1)

    @pl.when(k == 0)
    def _init():
        acc1_ref[...] = jnp.zeros_like(acc1_ref)
        acc2_ref[...] = jnp.zeros_like(acc2_ref)

    # Partial masked sums for this seq tile.
    # mask tile is (bt, st, 1): broadcast along lanes only (no relayout).
    acc1_ref[...] += jnp.sum(s1_ref[...] * m1_ref[...], axis=1)
    acc2_ref[...] += jnp.sum(s2_ref[...] * m2_ref[...], axis=1)

    @pl.when(k == pl.num_programs(1) - 1)
    def _finalize():
        e1 = acc1_ref[...] * inv1_ref[...]          # (bt, D) masked mean
        e2 = acc2_ref[...] * inv2_ref[...]          # (bt, D)
        dabs = jnp.abs(e1 - e2)
        prod = e1 * e2

        # classifier layer 1: four accumulated MXU dots (== concat(...) @ W1)
        h = (jnp.dot(e1, w1a_ref[...], preferred_element_type=jnp.float32)
             + jnp.dot(e2, w1b_ref[...], preferred_element_type=jnp.float32)
             + jnp.dot(dabs, w1c_ref[...], preferred_element_type=jnp.float32)
             + jnp.dot(prod, w1d_ref[...], preferred_element_type=jnp.float32)
             + b1_ref[...])
        h = jnp.tanh(h)

        # classifier layer 2 (lane-dense padded output)
        out_ref[...] = (jnp.dot(h, w2_ref[...],
                                preferred_element_type=jnp.float32)
                        + b2_ref[...]).astype(out_ref.dtype)


def pair_classifier(s1, s2, mask1, mask2, params,
                    *, batch_block=None, seq_block=None):
    """Plain-JAX glue (layout plumbing only) + tiled pallas_call.

    s1, s2  : (B, S, D) float32
    mask1/2 : (B, S) or (B, S, 1) float32
    params  : dict with w1 (4D, H), b1 (1, H) or (H,), w2 (H, C), b2 (1, C) or (C,)
    returns : logits (B, C) float32
    """
    # mask squeeze, matching the PyTorch forward
    if mask1.ndim > 2:
        mask1 = jnp.squeeze(mask1, axis=-1)
    if mask2.ndim > 2:
        mask2 = jnp.squeeze(mask2, axis=-1)

    B, S, D = s1.shape
    H = params["w1"].shape[1]
    C = params["w2"].shape[1]
    assert params["w1"].shape[0] == 4 * D

    f32 = jnp.float32
    s1 = s1.astype(f32)
    s2 = s2.astype(f32)
    mask1 = mask1.astype(f32)
    mask2 = mask2.astype(f32)

    # layout plumbing: lane-broadcastable masks + precomputed inverse lengths
    # (division-by-zero behaviour identical to the reference)
    m1e = mask1[:, :, None]                               # (B, S, 1)
    m2e = mask2[:, :, None]                               # (B, S, 1)
    inv1 = 1.0 / jnp.sum(mask1, axis=1, keepdims=True)    # (B, 1)
    inv2 = 1.0 / jnp.sum(mask2, axis=1, keepdims=True)    # (B, 1)

    # split w1 into its four (D, H) row slices and pad H/C to lane-dense widths
    Hp = _round_up(H, 128)
    Cp = _round_up(C, 128)
    w1 = params["w1"].astype(f32)
    w1a = jnp.pad(w1[0 * D:1 * D], ((0, 0), (0, Hp - H)))
    w1b = jnp.pad(w1[1 * D:2 * D], ((0, 0), (0, Hp - H)))
    w1c = jnp.pad(w1[2 * D:3 * D], ((0, 0), (0, Hp - H)))
    w1d = jnp.pad(w1[3 * D:4 * D], ((0, 0), (0, Hp - H)))
    b1 = jnp.pad(params["b1"].astype(f32).reshape(1, H), ((0, 0), (0, Hp - H)))
    w2 = jnp.pad(params["w2"].astype(f32), ((0, Hp - H), (0, Cp - C)))
    b2 = jnp.pad(params["b2"].astype(f32).reshape(1, C), ((0, 0), (0, Cp - C)))

    # tile sizes: multiples of 8 on sublane-facing dims; full extent fallback
    bt = batch_block if batch_block is not None else \
        _pick_block(B, (128, 64, 32, 16, 8))
    st = seq_block if seq_block is not None else \
        _pick_block(S, (512, 256, 128, 64, 32, 16, 8))
    assert B % bt == 0 and S % st == 0, "block sizes must divide B and S"
    grid = (B // bt, S // st)

    seq_spec = pl.BlockSpec((bt, st, D), lambda i, k: (i, k, 0))
    msk_spec = pl.BlockSpec((bt, st, 1), lambda i, k: (i, k, 0))
    inv_spec = pl.BlockSpec((bt, 1), lambda i, k: (i, 0))
    w1_spec = pl.BlockSpec((D, Hp), lambda i, k: (0, 0))   # VMEM-resident
    b1_spec = pl.BlockSpec((1, Hp), lambda i, k: (0, 0))
    w2_spec = pl.BlockSpec((Hp, Cp), lambda i, k: (0, 0))
    b2_spec = pl.BlockSpec((1, Cp), lambda i, k: (0, 0))

    out_padded = pl.pallas_call(
        _pair_classifier_kernel,
        out_shape=jax.ShapeDtypeStruct((B, Cp), f32),
        grid_spec=pltpu.PrefetchScalarGridSpec(
            num_scalar_prefetch=0,
            grid=grid,
            in_specs=[seq_spec, seq_spec,           # s1, s2
                      msk_spec, msk_spec,           # m1e, m2e
                      inv_spec, inv_spec,           # inv1, inv2
                      w1_spec, w1_spec, w1_spec, w1_spec, b1_spec,
                      w2_spec, b2_spec],
            out_specs=pl.BlockSpec((bt, Cp), lambda i, k: (i, 0)),
            scratch_shapes=[pltpu.VMEM((bt, D), f32),   # acc1
                            pltpu.VMEM((bt, D), f32)],  # acc2
        ),
        compiler_params=pltpu.CompilerParams(
            dimension_semantics=("parallel", "arbitrary"),
            vmem_limit_bytes=32 * 1024 * 1024,
        ),
    )(s1, s2, m1e, m2e, inv1, inv2, w1a, w1b, w1c, w1d, b1, w2, b2)

    return out_padded[:, :C]


def _reference(s1, s2, mask1, mask2, params):
    """Pure-JAX reference for correctness checking."""
    if mask1.ndim > 2:
        mask1 = jnp.squeeze(mask1, axis=-1)
    if mask2.ndim > 2:
        mask2 = jnp.squeeze(mask2, axis=-1)
    emb1 = (s1 * mask1[:, :, None]).sum(1) / mask1.sum(1, keepdims=True)
    emb2 = (s2 * mask2[:, :, None]).sum(1) / mask2.sum(1, keepdims=True)
    pair = jnp.concatenate([emb1, emb2, jnp.abs(emb1 - emb2), emb1 * emb2], -1)
    h = jnp.tanh(pair @ params["w1"] + params["b1"].reshape(1, -1))
    return h @ params["w2"] + params["b2"].reshape(1, -1)


if __name__ == "__main__":
    B, S, D, H, C = 16, 16, 128, 32, 3

    key = jax.random.PRNGKey(0)
    k_s1, k_s2, k_w1, k_b1, k_w2, k_b2 = jax.random.split(key, 6)

    s1 = jax.random.normal(k_s1, (B, S, D), dtype=jnp.float32)
    s2 = jax.random.normal(k_s2, (B, S, D), dtype=jnp.float32)

    # deterministic variable lengths (>= 1, so no division by zero); masks fed
    # as (B, S, 1) to exercise the squeeze path of the PyTorch forward
    lens1 = 1 + (jnp.arange(B, dtype=jnp.int32) * 3) % S
    lens2 = 1 + (jnp.arange(B, dtype=jnp.int32) * 5 + 2) % S
    pos = jnp.arange(S, dtype=jnp.int32)[None, :]
    mask1 = (pos < lens1[:, None]).astype(jnp.float32)[:, :, None]  # (B, S, 1)
    mask2 = (pos < lens2[:, None]).astype(jnp.float32)[:, :, None]  # (B, S, 1)

    params = {
        "w1": jax.random.normal(k_w1, (4 * D, H), dtype=jnp.float32) * 0.1,
        "b1": jax.random.normal(k_b1, (1, H), dtype=jnp.float32) * 0.1,
        "w2": jax.random.normal(k_w2, (H, C), dtype=jnp.float32) * 0.1,
        "b2": jax.random.normal(k_b2, (1, C), dtype=jnp.float32) * 0.1,
    }

    logits = pair_classifier(s1, s2, mask1, mask2, params)
    jax.block_until_ready(logits)

    ref = _reference(s1, s2, mask1, mask2, params)
    assert logits.shape == (B, C)
    assert jnp.allclose(logits, ref, atol=5e-5, rtol=5e-5), "mismatch vs reference"

    print("KERNEL_OK")
</pallas_src>

<mosaic_0001>
module attributes {stable_mosaic.version = 11 : i64} {
  func.func @_pair_classifier_kernel(%arg0: i32, %arg1: i32, %arg2: memref<8x8x128xf32, #tpu.memory_space<vmem>>, %arg3: memref<8x8x128xf32, #tpu.memory_space<vmem>>, %arg4: memref<8x8x1xf32, #tpu.memory_space<vmem>>, %arg5: memref<8x8x1xf32, #tpu.memory_space<vmem>>, %arg6: memref<8x1xf32, #tpu.memory_space<vmem>>, %arg7: memref<8x1xf32, #tpu.memory_space<vmem>>, %arg8: memref<128x128xf32, #tpu.memory_space<vmem>>, %arg9: memref<128x128xf32, #tpu.memory_space<vmem>>, %arg10: memref<128x128xf32, #tpu.memory_space<vmem>>, %arg11: memref<128x128xf32, #tpu.memory_space<vmem>>, %arg12: memref<1x128xf32, #tpu.memory_space<vmem>>, %arg13: memref<128x128xf32, #tpu.memory_space<vmem>>, %arg14: memref<1x128xf32, #tpu.memory_space<vmem>>, %arg15: memref<8x128xf32, #tpu.memory_space<vmem>>, %arg16: memref<8x128xf32, #tpu.memory_space<vmem>>, %arg17: memref<8x128xf32, #tpu.memory_space<vmem>>) attributes {dimension_semantics = [#tpu.dimension_semantics<parallel>, #tpu.dimension_semantics<arbitrary>], iteration_bounds = array<i64: 2, 2>, scalar_prefetch = 0 : i64, scratch_operands = 2 : i64, tpu.core_type = #tpu.core_type<tc>, window_params = [{transform_indices = @transform_0, window_bounds = array<i64: 8, 8, 128>}, {transform_indices = @transform_1, window_bounds = array<i64: 8, 8, 128>}, {transform_indices = @transform_2, window_bounds = array<i64: 8, 8, 1>}, {transform_indices = @transform_3, window_bounds = array<i64: 8, 8, 1>}, {transform_indices = @transform_4, window_bounds = array<i64: 8, 1>}, {transform_indices = @transform_5, window_bounds = array<i64: 8, 1>}, {pipeline_mode = #tpu.pipeline_mode<synchronous>, transform_indices = @transform_6, window_bounds = array<i64: 128, 128>}, {pipeline_mode = #tpu.pipeline_mode<synchronous>, transform_indices = @transform_7, window_bounds = array<i64: 128, 128>}, {pipeline_mode = #tpu.pipeline_mode<synchronous>, transform_indices = @transform_8, window_bounds = array<i64: 128, 128>}, {pipeline_mode = #tpu.pipeline_mode<synchronous>, transform_indices = @transform_9, window_bounds = array<i64: 128, 128>}, {pipeline_mode = #tpu.pipeline_mode<synchronous>, transform_indices = @transform_10, window_bounds = array<i64: 1, 128>}, {pipeline_mode = #tpu.pipeline_mode<synchronous>, transform_indices = @transform_11, window_bounds = array<i64: 128, 128>}, {pipeline_mode = #tpu.pipeline_mode<synchronous>, transform_indices = @transform_12, window_bounds = array<i64: 1, 128>}, {transform_indices = @transform_13, window_bounds = array<i64: 8, 128>}]} {
    %c0_i32 = arith.constant 0 : i32
    %0 = arith.cmpi eq, %arg1, %c0_i32 : i32
    %1 = arith.extui %0 : i1 to i32
    %c0_i32_0 = arith.constant 0 : i32
    %2 = arith.cmpi ne, %1, %c0_i32_0 : i32
    scf.if %2 {
      %cst_22 = arith.constant 0.000000e+00 : f32
      %22 = vector.broadcast %cst_22 : f32 to vector<8x128xf32>
      %c0_23 = arith.constant 0 : index
      %c0_24 = arith.constant 0 : index
      %23 = vector.load %arg16[%c0_23, %c0_24] : memref<8x128xf32, #tpu.memory_space<vmem>>, vector<8x128xf32>
      tpu.vector_store %arg16[%c0_23, %c0_24], %22 {strides = array<i32>} : memref<8x128xf32, #tpu.memory_space<vmem>>, vector<8x128xf32>,
      %cst_25 = arith.constant 0.000000e+00 : f32
      %24 = vector.broadcast %cst_25 : f32 to vector<8x128xf32>
      %c0_26 = arith.constant 0 : index
      %c0_27 = arith.constant 0 : index
      %25 = vector.load %arg17[%c0_26, %c0_27] : memref<8x128xf32, #tpu.memory_space<vmem>>, vector<8x128xf32>
      tpu.vector_store %arg17[%c0_26, %c0_27], %24 {strides = array<i32>} : memref<8x128xf32, #tpu.memory_space<vmem>>, vector<8x128xf32>,
    } else {
    }
    %c0 = arith.constant 0 : index
    %c0_1 = arith.constant 0 : index
    %3 = vector.load %arg16[%c0, %c0_1] : memref<8x128xf32, #tpu.memory_space<vmem>>, vector<8x128xf32>
    %c0_2 = arith.constant 0 : index
    %c0_3 = arith.constant 0 : index
    %c0_4 = arith.constant 0 : index
    %4 = vector.load %arg2[%c0_2, %c0_3, %c0_4] : memref<8x8x128xf32, #tpu.memory_space<vmem>>, vector<8x8x128xf32>
    %c0_5 = arith.constant 0 : index
    %c0_6 = arith.constant 0 : index
    %c0_7 = arith.constant 0 : index
    %5 = vector.load %arg4[%c0_5, %c0_6, %c0_7] : memref<8x8x1xf32, #tpu.memory_space<vmem>>, vector<8x8x1xf32>
    %6 = vector.broadcast %5 : vector<8x8x1xf32> to vector<8x8x128xf32>
    %7 = arith.mulf %4, %6 : vector<8x8x128xf32>
    %cst = arith.constant dense<0.000000e+00> : vector<8x128xf32>
    %8 = vector.multi_reduction <add>, %7, %cst [1] : vector<8x8x128xf32> to vector<8x128xf32>
    %9 = arith.addf %3, %8 : vector<8x128xf32>
    %c0_8 = arith.constant 0 : index
    %c0_9 = arith.constant 0 : index
    %10 = vector.load %arg16[%c0_8, %c0_9] : memref<8x128xf32, #tpu.memory_space<vmem>>, vector<8x128xf32>
    tpu.vector_store %arg16[%c0_8, %c0_9], %9 {strides = array<i32>} : memref<8x128xf32, #tpu.memory_space<vmem>>, vector<8x128xf32>,
    %c0_10 = arith.constant 0 : index
    %c0_11 = arith.constant 0 : index
    %11 = vector.load %arg17[%c0_10, %c0_11] : memref<8x128xf32, #tpu.memory_space<vmem>>, vector<8x128xf32>
    %c0_12 = arith.constant 0 : index
    %c0_13 = arith.constant 0 : index
    %c0_14 = arith.constant 0 : index
    %12 = vector.load %arg3[%c0_12, %c0_13, %c0_14] : memref<8x8x128xf32, #tpu.memory_space<vmem>>, vector<8x8x128xf32>
    %c0_15 = arith.constant 0 : index
    %c0_16 = arith.constant 0 : index
    %c0_17 = arith.constant 0 : index
    %13 = vector.load %arg5[%c0_15, %c0_16, %c0_17] : memref<8x8x1xf32, #tpu.memory_space<vmem>>, vector<8x8x1xf32>
    %14 = vector.broadcast %13 : vector<8x8x1xf32> to vector<8x8x128xf32>
    %15 = arith.mulf %12, %14 : vector<8x8x128xf32>
    %cst_18 = arith.constant dense<0.000000e+00> : vector<8x128xf32>
    %16 = vector.multi_reduction <add>, %15, %cst_18 [1] : vector<8x8x128xf32> to vector<8x128xf32>
    %17 = arith.addf %11, %16 : vector<8x128xf32>
    %c0_19 = arith.constant 0 : index
    %c0_20 = arith.constant 0 : index
    %18 = vector.load %arg17[%c0_19, %c0_20] : memref<8x128xf32, #tpu.memory_space<vmem>>, vector<8x128xf32>
    tpu.vector_store %arg17[%c0_19, %c0_20], %17 {strides = array<i32>} : memref<8x128xf32, #tpu.memory_space<vmem>>, vector<8x128xf32>,
    %c1_i32 = arith.constant 1 : i32
    %19 = arith.cmpi eq, %arg1, %c1_i32 : i32
    %20 = arith.extui %19 : i1 to i32
    %c0_i32_21 = arith.constant 0 : i32
    %21 = arith.cmpi ne, %20, %c0_i32_21 : i32
    scf.if %21 {
      %c0_22 = arith.constant 0 : index
      %c0_23 = arith.constant 0 : index
      %22 = vector.load %arg16[%c0_22, %c0_23] : memref<8x128xf32, #tpu.memory_space<vmem>>, vector<8x128xf32>
      %c0_24 = arith.constant 0 : index
      %c0_25 = arith.constant 0 : index
      %23 = vector.load %arg6[%c0_24, %c0_25] : memref<8x1xf32, #tpu.memory_space<vmem>>, vector<8x1xf32>
      %24 = vector.broadcast %23 : vector<8x1xf32> to vector<8x128xf32>
      %25 = arith.mulf %22, %24 : vector<8x128xf32>
      %c0_26 = arith.constant 0 : index
      %c0_27 = arith.constant 0 : index
      %26 = vector.load %arg17[%c0_26, %c0_27] : memref<8x128xf32, #tpu.memory_space<vmem>>, vector<8x128xf32>
      %c0_28 = arith.constant 0 : index
      %c0_29 = arith.constant 0 : index
      %27 = vector.load %arg7[%c0_28, %c0_29] : memref<8x1xf32, #tpu.memory_space<vmem>>, vector<8x1xf32>
      %28 = vector.broadcast %27 : vector<8x1xf32> to vector<8x128xf32>
      %29 = arith.mulf %26, %28 : vector<8x128xf32>
      %30 = arith.subf %25, %29 : vector<8x128xf32>
      %31 = math.absf %30 : vector<8x128xf32>
      %32 = arith.mulf %25, %29 : vector<8x128xf32>
      %c0_30 = arith.constant 0 : index
      %c0_31 = arith.constant 0 : index
      %33 = vector.load %arg8[%c0_30, %c0_31] : memref<128x128xf32, #tpu.memory_space<vmem>>, vector<128x128xf32>
      %cst_32 = arith.constant dense<0.000000e+00> : vector<8x128xf32>
      %34 = tpu.matmul %25, %33, %cst_32 {dimension_numbers = #tpu.dot_dimension_numbers<[1], [0], [0], [1], [0, 0, 1, 1], [], []>} : vector<8x128xf32>, vector<128x128xf32>, vector<8x128xf32> -> vector<8x128xf32>
      %c0_33 = arith.constant 0 : index
      %c0_34 = arith.constant 0 : index
      %35 = vector.load %arg9[%c0_33, %c0_34] : memref<128x128xf32, #tpu.memory_space<vmem>>, vector<128x128xf32>
      %cst_35 = arith.constant dense<0.000000e+00> : vector<8x128xf32>
      %36 = tpu.matmul %29, %35, %cst_35 {dimension_numbers = #tpu.dot_dimension_numbers<[1], [0], [0], [1], [0, 0, 1, 1], [], []>} : vector<8x128xf32>, vector<128x128xf32>, vector<8x128xf32> -> vector<8x128xf32>
      %37 = arith.addf %34, %36 : vector<8x128xf32>
      %c0_36 = arith.constant 0 : index
      %c0_37 = arith.constant 0 : index
      %38 = vector.load %arg10[%c0_36, %c0_37] : memref<128x128xf32, #tpu.memory_space<vmem>>, vector<128x128xf32>
      %cst_38 = arith.constant dense<0.000000e+00> : vector<8x128xf32>
      %39 = tpu.matmul %31, %38, %cst_38 {dimension_numbers = #tpu.dot_dimension_numbers<[1], [0], [0], [1], [0, 0, 1, 1], [], []>} : vector<8x128xf32>, vector<128x128xf32>, vector<8x128xf32> -> vector<8x128xf32>
      %40 = arith.addf %37, %39 : vector<8x128xf32>
      %c0_39 = arith.constant 0 : index
      %c0_40 = arith.constant 0 : index
      %41 = vector.load %arg11[%c0_39, %c0_40] : memref<128x128xf32, #tpu.memory_space<vmem>>, vector<128x128xf32>
      %cst_41 = arith.constant dense<0.000000e+00> : vector<8x128xf32>
      %42 = tpu.matmul %32, %41, %cst_41 {dimension_numbers = #tpu.dot_dimension_numbers<[1], [0], [0], [1], [0, 0, 1, 1], [], []>} : vector<8x128xf32>, vector<128x128xf32>, vector<8x128xf32> -> vector<8x128xf32>
      %43 = arith.addf %40, %42 : vector<8x128xf32>
      %c0_42 = arith.constant 0 : index
      %c0_43 = arith.constant 0 : index
      %44 = vector.load %arg12[%c0_42, %c0_43] : memref<1x128xf32, #tpu.memory_space<vmem>>, vector<1x128xf32>
      %45 = vector.broadcast %44 : vector<1x128xf32> to vector<8x128xf32>
      %46 = arith.addf %43, %45 : vector<8x128xf32>
      %47 = math.tanh %46 : vector<8x128xf32>
      %c0_44 = arith.constant 0 : index
      %c0_45 = arith.constant 0 : index
      %48 = vector.load %arg13[%c0_44, %c0_45] : memref<128x128xf32, #tpu.memory_space<vmem>>, vector<128x128xf32>
      %cst_46 = arith.constant dense<0.000000e+00> : vector<8x128xf32>
      %49 = tpu.matmul %47, %48, %cst_46 {dimension_numbers = #tpu.dot_dimension_numbers<[1], [0], [0], [1], [0, 0, 1, 1], [], []>} : vector<8x128xf32>, vector<128x128xf32>, vector<8x128xf32> -> vector<8x128xf32>
      %c0_47 = arith.constant 0 : index
      %c0_48 = arith.constant 0 : index
      %50 = vector.load %arg14[%c0_47, %c0_48] : memref<1x128xf32, #tpu.memory_space<vmem>>, vector<1x128xf32>
      %51 = vector.broadcast %50 : vector<1x128xf32> to vector<8x128xf32>
      %52 = arith.addf %49, %51 : vector<8x128xf32>
      %c0_49 = arith.constant 0 : index
      %c0_50 = arith.constant 0 : index
      %53 = vector.load %arg15[%c0_49, %c0_50] : memref<8x128xf32, #tpu.memory_space<vmem>>, vector<8x128xf32>
      tpu.vector_store %arg15[%c0_49, %c0_50], %52 {strides = array<i32>} : memref<8x128xf32, #tpu.memory_space<vmem>>, vector<8x128xf32>,
    } else {
    }
    return
  }
  func.func @transform_0(%arg0: i32, %arg1: i32) -> (i32, i32, i32) {
    %c0_i32 = arith.constant 0 : i32
    %c0_i32_0 = arith.constant 0 : i32
    return %arg0, %arg1, %c0_i32 : i32, i32, i32
  }
  func.func @transform_1(%arg0: i32, %arg1: i32) -> (i32, i32, i32) {
    %c0_i32 = arith.constant 0 : i32
    %c0_i32_0 = arith.constant 0 : i32
    return %arg0, %arg1, %c0_i32 : i32, i32, i32
  }
  func.func @transform_2(%arg0: i32, %arg1: i32) -> (i32, i32, i32) {
    %c0_i32 = arith.constant 0 : i32
    %c0_i32_0 = arith.constant 0 : i32
    return %arg0, %arg1, %c0_i32 : i32, i32, i32
  }
  func.func @transform_3(%arg0: i32, %arg1: i32) -> (i32, i32, i32) {
    %c0_i32 = arith.constant 0 : i32
    %c0_i32_0 = arith.constant 0 : i32
    return %arg0, %arg1, %c0_i32 : i32, i32, i32
  }
  func.func @transform_4(%arg0: i32, %arg1: i32) -> (i32, i32) {
    %c0_i32 = arith.constant 0 : i32
    %c0_i32_0 = arith.constant 0 : i32
    return %arg0, %c0_i32 : i32, i32
  }
  func.func @transform_5(%arg0: i32, %arg1: i32) -> (i32, i32) {
    %c0_i32 = arith.constant 0 : i32
    %c0_i32_0 = arith.constant 0 : i32
    return %arg0, %c0_i32 : i32, i32
  }
  func.func @transform_6(%arg0: i32, %arg1: i32) -> (i32, i32) {
    %c0_i32 = arith.constant 0 : i32
    %c0_i32_0 = arith.constant 0 : i32
    %c0_i32_1 = arith.constant 0 : i32
    return %c0_i32, %c0_i32_0 : i32, i32
  }
  func.func @transform_7(%arg0: i32, %arg1: i32) -> (i32, i32) {
    %c0_i32 = arith.constant 0 : i32
    %c0_i32_0 = arith.constant 0 : i32
    %c0_i32_1 = arith.constant 0 : i32
    return %c0_i32, %c0_i32_0 : i32, i32
  }
  func.func @transform_8(%arg0: i32, %arg1: i32) -> (i32, i32) {
    %c0_i32 = arith.constant 0 : i32
    %c0_i32_0 = arith.constant 0 : i32
    %c0_i32_1 = arith.constant 0 : i32
    return %c0_i32, %c0_i32_0 : i32, i32
  }
  func.func @transform_9(%arg0: i32, %arg1: i32) -> (i32, i32) {
    %c0_i32 = arith.constant 0 : i32
    %c0_i32_0 = arith.constant 0 : i32
    %c0_i32_1 = arith.constant 0 : i32
    return %c0_i32, %c0_i32_0 : i32, i32
  }
  func.func @transform_10(%arg0: i32, %arg1: i32) -> (i32, i32) {
    %c0_i32 = arith.constant 0 : i32
    %c0_i32_0 = arith.constant 0 : i32
    %c0_i32_1 = arith.constant 0 : i32
    return %c0_i32, %c0_i32_0 : i32, i32
  }
  func.func @transform_11(%arg0: i32, %arg1: i32) -> (i32, i32) {
    %c0_i32 = arith.constant 0 : i32
    %c0_i32_0 = arith.constant 0 : i32
    %c0_i32_1 = arith.constant 0 : i32
    return %c0_i32, %c0_i32_0 : i32, i32
  }
  func.func @transform_12(%arg0: i32, %arg1: i32) -> (i32, i32) {
    %c0_i32 = arith.constant 0 : i32
    %c0_i32_0 = arith.constant 0 : i32
    %c0_i32_1 = arith.constant 0 : i32
    return %c0_i32, %c0_i32_0 : i32, i32
  }
  func.func @transform_13(%arg0: i32, %arg1: i32) -> (i32, i32) {
    %c0_i32 = arith.constant 0 : i32
    %c0_i32_0 = arith.constant 0 : i32
    return %arg0, %c0_i32 : i32, i32
  }
}

</mosaic_0001>

<llo_original>
// kernel: tpu_custom_call.1
$region0: #{tpu_custom_call.1}
  #allocation0 [shape = 'u32[]', space=smem, size = 0x4, offset = 0x4, fixed_abs, tag = 'smem constant byte address 0x4 - core index']
  #allocation1 [shape = 'u32[144,128]{1,0:T(1,128)}', space=vmem, size = 0x12000, scoped, tag = 'internal scratch']
  #allocation2 [shape = 'f32[8,128]{1,0:T(8,128)}', space=vmem, size = 0x1000, scoped, tag = 'scratch operand']
  #allocation3 [shape = 'f32[8,128]{1,0:T(8,128)}', space=vmem, size = 0x1000, scoped, tag = 'scratch operand']
  %s0 = inlined_call_operand.vmem [shape: f32[16,16,128], index: 0, kind: input, shape index: {}]
  %s1 = inlined_call_operand.vmem [shape: f32[16,16,128], index: 1, kind: input, shape index: {}]
  %s2 = inlined_call_operand.vmem [shape: f32[16,16,1], index: 2, kind: input, shape index: {}]
  %s3 = inlined_call_operand.vmem [shape: f32[16,16,1], index: 3, kind: input, shape index: {}]
  %s4 = inlined_call_operand.vmem [shape: f32[16,1], index: 4, kind: input, shape index: {}]
  %s5 = inlined_call_operand.vmem [shape: f32[16,1], index: 5, kind: input, shape index: {}]
  %s6 = inlined_call_operand.hbm [shape: f32[128,128], index: 6, kind: input, shape index: {}]
  %s7 = inlined_call_operand.hbm [shape: f32[128,128], index: 7, kind: input, shape index: {}]
  %s8 = inlined_call_operand.hbm [shape: f32[128,128], index: 8, kind: input, shape index: {}]
  %s9 = inlined_call_operand.hbm [shape: f32[128,128], index: 9, kind: input, shape index: {}]
  %s10 = inlined_call_operand.vmem [shape: f32[1,128], index: 10, kind: input, shape index: {}]
  %s11 = inlined_call_operand.hbm [shape: f32[128,128], index: 11, kind: input, shape index: {}]
  %s12 = inlined_call_operand.vmem [shape: f32[1,128], index: 12, kind: input, shape index: {}]
  %s13 = inlined_call_operand.hbm [shape: f32[16,128], index: 13, kind: output, shape index: {}]
  %s14 = sld [smem:[#allocation0]]
  $region265: #{tpu_custom_call.1} parent=0
    _
  %s16 = ssub.s32 1, %s14
  %s17 = scalar_select 0, %s16, %s14
  $region1: #{tpu_custom_call.1} parent=0
    #allocation4 [shape = 'u8[65536]{0}', space=vmem, size = 0x10000, scoped, tag = 'input window, operand 0']
    #allocation5 [shape = 'u8[65536]{0}', space=vmem, size = 0x10000, scoped, tag = 'input window, operand 1']
    #allocation6 [shape = 'u8[65536]{0}', space=vmem, size = 0x10000, scoped, tag = 'input window, operand 2']
    #allocation7 [shape = 'u8[65536]{0}', space=vmem, size = 0x10000, scoped, tag = 'input window, operand 3']
    #allocation8 [shape = 'u8[65536]{0}', space=vmem, size = 0x10000, scoped, tag = 'input window, operand 6, single buffered']
    #allocation9 [shape = 's32[2]{0}', space=sflag, size = 0x8, scoped, tag = 'scoped memory for tpu_custom_call.1']
    #allocation10 [shape = 's32[2]{0}', space=sflag, size = 0x8, scoped, tag = 'scoped memory for tpu_custom_call.1']
    #allocation11 [shape = 'u8[65536]{0}', space=vmem, size = 0x10000, scoped, tag = 'input window, operand 7, single buffered']
    #allocation12 [shape = 's32[1]{0}', space=sflag, size = 0x4, scoped, tag = 'scoped memory for tpu_custom_call.1']
    #allocation13 [shape = 'u8[65536]{0}', space=vmem, size = 0x10000, scoped, tag = 'input window, operand 8, single buffered']
    #allocation14 [shape = 'u8[65536]{0}', space=vmem, size = 0x10000, scoped, tag = 'input window, operand 9, single buffered']
    #allocation15 [shape = 's32[1]{0}', space=sflag, size = 0x4, scoped, tag = 'scoped memory for tpu_custom_call.1']
    #allocation16 [shape = 'u8[65536]{0}', space=vmem, size = 0x10000, scoped, tag = 'input window, operand 11, single buffered']
    #allocation17 [shape = 'u8[8192]{0}', space=vmem, size = 0x2000, scoped, tag = 'output window, operand 0']
    %18 = vsyncpa [#allocation9], 0
    %19 = vsyncpa [#allocation12], 0
    %20 = vsyncpa [#allocation15], 0
    %21 = vsyncpa [#allocation10], 0
    %s22 = scalar_lea.sflag [#allocation10], 1
    %23 = vsyncpa %s22, 0
    loop: start=0, step=1, limit=6
    $region2: #{tpu_custom_call.1} parent=1 // loop_pre_header
      _
    $region3: #{tpu_custom_call.1} parent=1 // loop_header
      %s25 = sphi 0, %s29
      %p26 = scmp.ge.s32.totalorder %s25, 6
      %s32 = sphi 0, %s44
      %s33 = sphi 0, %s40
      %s34 = sphi 0, %s32
      %s35 = sphi 0, %s33
      %s36 = sphi 0, %s34
      %s37 = sphi 0, %s35
      %s49 = sphi 0, %s51
      %s52 = sphi 0, %s49
      %s53 = sphi 0, %s52
      %s69 = sphi 0, %s53
      %s77 = sphi 0, %s79
      %s80 = sphi 0, %s77
      %s81 = sphi 0, %s80
      %s97 = sphi 0, %s81
      %s105 = sphi 0, %s107
      %s108 = sphi 0, %s105
      %s109 = sphi 0, %s108
      %s125 = sphi 0, %s109
      %s133 = sphi 0, %s135
      %s136 = sphi 0, %s133
      %s137 = sphi 0, %s136
      %s153 = sphi 0, %s137
      %s159 = sphi 0, %s161
      %s162 = sphi 0, %s159
      %s163 = sphi 0, %s162
      %s179 = sphi 0, %s163
      %s185 = sphi 0, %s187
      %s188 = sphi 0, %s185
      %s189 = sphi 0, %s188
      %s205 = sphi 0, %s189
      %s209 = sphi 0, %s209
      %s211 = sphi 0, %s209
      %s212 = sphi 0, %s211
      %s226 = sphi 0, %s212
      %s230 = sphi 0, %s230
      %s232 = sphi 0, %s230
      %s233 = sphi 0, %s232
      %s247 = sphi 0, %s233
      %s251 = sphi 0, %s251
      %s253 = sphi 0, %s251
      %s254 = sphi 0, %s253
      %s268 = sphi 0, %s254
      %s272 = sphi 0, %s272
      %s274 = sphi 0, %s272
      %s275 = sphi 0, %s274
      %s289 = sphi 0, %s275
      %s293 = sphi 0, %s293
      %s295 = sphi 0, %s293
      %s296 = sphi 0, %s295
      %s310 = sphi 0, %s296
      %s314 = sphi 0, %s314
      %s316 = sphi 0, %s314
      %s317 = sphi 0, %s316
      %s331 = sphi 0, %s317
      %s335 = sphi 0, %s335
      %s337 = sphi 0, %s335
      %s338 = sphi 0, %s337
      %s352 = sphi 0, %s338
      %s358 = sphi 0, %s360
      %s361 = sphi 0, %s358
      %s362 = sphi 0, %s361
      %s378 = sphi 0, %s362
    $region4: #{tpu_custom_call.1} parent=1 // loop_header_branch
      %28 = sbr.rel (%p26) target = $region8
    $region5: #{tpu_custom_call.1} parent=1 // loop_body
      %s30 = ssub.s32 %s25, 1
      %s31 = ssub.s32 %s25, 2
      %s38 = sadd.s32 1, %s33
      %p39 = scmp.ge.s32.totalorder %s38, 2
      %s40 = scalar_select %p39, 0, %s38
      %s41 = sadd.s32 1, %s32
      %s42 = scalar_select %p39, %s41, %s32
      %p43 = scmp.ge.s32.totalorder %s42, 2
      %s44 = scalar_select %p43, 0, %s42
      %s45 = ssub.s32 %s32, %s44
      %s46 = ssub.s32 %s33, %s40
      %s47 = sor.u32 %s45, %s46
      %p48 = scmp.eq.s32.totalorder %s47, 0
      %s50 = sadd.s32 %s49, 1
      %s51 = scalar_select %p48, %s49, %s50
      %p54 = pneg %p48
      %p55 = scmp.eq.s32.totalorder %s25, 3
      %p56 = por %p54, %p55
      %p57 = scmp.ne.s32.totalorder %s49, %s52
      %p58 = scmp.eq.s32.totalorder %s25, 0
      %p59 = por %p57, %p58
      %p60 = scmp.ne.s32.totalorder %s49, %s52
      %p61 = scmp.eq.s32.totalorder %s30, 3
      %p62 = por %p60, %p61
      %p63 = scmp.ne.s32.totalorder %s52, %s53
      %p64 = scmp.eq.s32.totalorder %s30, 0
      %p65 = por %p63, %p64
      %p66 = scmp.ne.s32.totalorder %s52, %s53
      %p67 = scmp.eq.s32.totalorder %s31, 3
      %p68 = por %p66, %p67
      %p70 = scmp.ne.s32.totalorder %s53, %s69
      %p71 = scmp.eq.s32.totalorder %s31, 0
      %p72 = por %p70, %p71
      %s73 = ssub.s32 %s32, %s44
      %s74 = ssub.s32 %s33, %s40
      %s75 = sor.u32 %s73, %s74
      %p76 = scmp.eq.s32.totalorder %s75, 0
      %s78 = sadd.s32 %s77, 1
      %s79 = scalar_select %p76, %s77, %s78
      %p82 = pneg %p76
      %p83 = scmp.eq.s32.totalorder %s25, 3
      %p84 = por %p82, %p83
      %p85 = scmp.ne.s32.totalorder %s77, %s80
      %p86 = scmp.eq.s32.totalorder %s25, 0
      %p87 = por %p85, %p86
      %p88 = scmp.ne.s32.totalorder %s77, %s80
      %p89 = scmp.eq.s32.totalorder %s30, 3
      %p90 = por %p88, %p89
      %p91 = scmp.ne.s32.totalorder %s80, %s81
      %p92 = scmp.eq.s32.totalorder %s30, 0
      %p93 = por %p91, %p92
      %p94 = scmp.ne.s32.totalorder %s80, %s81
      %p95 = scmp.eq.s32.totalorder %s31, 3
      %p96 = por %p94, %p95
      %p98 = scmp.ne.s32.totalorder %s81, %s97
      %p99 = scmp.eq.s32.totalorder %s31, 0
      %p100 = por %p98, %p99
      %s101 = ssub.s32 %s32, %s44
      %s102 = ssub.s32 %s33, %s40
      %s103 = sor.u32 %s101, %s102
      %p104 = scmp.eq.s32.totalorder %s103, 0
      %s106 = sadd.s32 %s105, 1
      %s107 = scalar_select %p104, %s105, %s106
      %p110 = pneg %p104
      %p111 = scmp.eq.s32.totalorder %s25, 3
      %p112 = por %p110, %p111
      %p113 = scmp.ne.s32.totalorder %s105, %s108
      %p114 = scmp.eq.s32.totalorder %s25, 0
      %p115 = por %p113, %p114
      %p116 = scmp.ne.s32.totalorder %s105, %s108
      %p117 = scmp.eq.s32.totalorder %s30, 3
      %p118 = por %p116, %p117
      %p119 = scmp.ne.s32.totalorder %s108, %s109
      %p120 = scmp.eq.s32.totalorder %s30, 0
      %p121 = por %p119, %p120
      %p122 = scmp.ne.s32.totalorder %s108, %s109
      %p123 = scmp.eq.s32.totalorder %s31, 3
      %p124 = por %p122, %p123
      %p126 = scmp.ne.s32.totalorder %s109, %s125
      %p127 = scmp.eq.s32.totalorder %s31, 0
      %p128 = por %p126, %p127
      %s129 = ssub.s32 %s32, %s44
      %s130 = ssub.s32 %s33, %s40
      %s131 = sor.u32 %s129, %s130
      %p132 = scmp.eq.s32.totalorder %s131, 0
      %s134 = sadd.s32 %s133, 1
      %s135 = scalar_select %p132, %s133, %s134
      %p138 = pneg %p132
      %p139 = scmp.eq.s32.totalorder %s25, 3
      %p140 = por %p138, %p139
      %p141 = scmp.ne.s32.totalorder %s133, %s136
      %p142 = scmp.eq.s32.totalorder %s25, 0
      %p143 = por %p141, %p142
      %p144 = scmp.ne.s32.totalorder %s133, %s136
      %p145 = scmp.eq.s32.totalorder %s30, 3
      %p146 = por %p144, %p145
      %p147 = scmp.ne.s32.totalorder %s136, %s137
      %p148 = scmp.eq.s32.totalorder %s30, 0
      %p149 = por %p147, %p148
      %p150 = scmp.ne.s32.totalorder %s136, %s137
      %p151 = scmp.eq.s32.totalorder %s31, 3
      %p152 = por %p150, %p151
      %p154 = scmp.ne.s32.totalorder %s137, %s153
      %p155 = scmp.eq.s32.totalorder %s31, 0
      %p156 = por %p154, %p155
      %s157 = ssub.s32 %s32, %s44
      %p158 = scmp.eq.s32.totalorder %s157, 0
      %s160 = sadd.s32 %s159, 1
      %s161 = scalar_select %p158, %s159, %s160
      %p164 = pneg %p158
      %p165 = scmp.eq.s32.totalorder %s25, 3
      %p166 = por %p164, %p165
      %p167 = scmp.ne.s32.totalorder %s159, %s162
      %p168 = scmp.eq.s32.totalorder %s25, 0
      %p169 = por %p167, %p168
      %p170 = scmp.ne.s32.totalorder %s159, %s162
      %p171 = scmp.eq.s32.totalorder %s30, 3
      %p172 = por %p170, %p171
      %p173 = scmp.ne.s32.totalorder %s162, %s163
      %p174 = scmp.eq.s32.totalorder %s30, 0
      %p175 = por %p173, %p174
      %p176 = scmp.ne.s32.totalorder %s162, %s163
      %p177 = scmp.eq.s32.totalorder %s31, 3
      %p178 = por %p176, %p177
      %p180 = scmp.ne.s32.totalorder %s163, %s179
      %p181 = scmp.eq.s32.totalorder %s31, 0
      %p182 = por %p180, %p181
      %s183 = ssub.s32 %s32, %s44
      %p184 = scmp.eq.s32.totalorder %s183, 0
      %s186 = sadd.s32 %s185, 1
      %s187 = scalar_select %p184, %s185, %s186
      %p190 = pneg %p184
      %p191 = scmp.eq.s32.totalorder %s25, 3
      %p192 = por %p190, %p191
      %p193 = scmp.ne.s32.totalorder %s185, %s188
      %p194 = scmp.eq.s32.totalorder %s25, 0
      %p195 = por %p193, %p194
      %p196 = scmp.ne.s32.totalorder %s185, %s188
      %p197 = scmp.eq.s32.totalorder %s30, 3
      %p198 = por %p196, %p197
      %p199 = scmp.ne.s32.totalorder %s188, %s189
      %p200 = scmp.eq.s32.totalorder %s30, 0
      %p201 = por %p199, %p200
      %p202 = scmp.ne.s32.totalorder %s188, %s189
      %p203 = scmp.eq.s32.totalorder %s31, 3
      %p204 = por %p202, %p203
      %p206 = scmp.ne.s32.totalorder %s189, %s205
      %p207 = scmp.eq.s32.totalorder %s31, 0
      %p208 = por %p206, %p207
      %s210 = sadd.s32 %s209, 1
      %p213 = scmp.eq.s32.totalorder %s25, 3
      %p214 = scmp.ne.s32.totalorder %s209, %s211
      %p215 = scmp.eq.s32.totalorder %s25, 0
      %p216 = por %p214, %p215
      %p217 = scmp.ne.s32.totalorder %s209, %s211
      %p218 = scmp.eq.s32.totalorder %s30, 3
      %p219 = por %p217, %p218
      %p220 = scmp.ne.s32.totalorder %s211, %s212
      %p221 = scmp.eq.s32.totalorder %s30, 0
      %p222 = por %p220, %p221
      %p223 = scmp.ne.s32.totalorder %s211, %s212
      %p224 = scmp.eq.s32.totalorder %s31, 3
      %p225 = por %p223, %p224
      %p227 = scmp.ne.s32.totalorder %s212, %s226
      %p228 = scmp.eq.s32.totalorder %s31, 0
      %p229 = por %p227, %p228
      %s231 = sadd.s32 %s230, 1
      %p234 = scmp.eq.s32.totalorder %s25, 3
      %p235 = scmp.ne.s32.totalorder %s230, %s232
      %p236 = scmp.eq.s32.totalorder %s25, 0
      %p237 = por %p235, %p236
      %p238 = scmp.ne.s32.totalorder %s230, %s232
      %p239 = scmp.eq.s32.totalorder %s30, 3
      %p240 = por %p238, %p239
      %p241 = scmp.ne.s32.totalorder %s232, %s233
      %p242 = scmp.eq.s32.totalorder %s30, 0
      %p243 = por %p241, %p242
      %p244 = scmp.ne.s32.totalorder %s232, %s233
      %p245 = scmp.eq.s32.totalorder %s31, 3
      %p246 = por %p244, %p245
      %p248 = scmp.ne.s32.totalorder %s233, %s247
      %p249 = scmp.eq.s32.totalorder %s31, 0
      %p250 = por %p248, %p249
      %s252 = sadd.s32 %s251, 1
      %p255 = scmp.eq.s32.totalorder %s25, 3
      %p256 = scmp.ne.s32.totalorder %s251, %s253
      %p257 = scmp.eq.s32.totalorder %s25, 0
      %p258 = por %p256, %p257
      %p259 = scmp.ne.s32.totalorder %s251, %s253
      %p260 = scmp.eq.s32.totalorder %s30, 3
      %p261 = por %p259, %p260
      %p262 = scmp.ne.s32.totalorder %s253, %s254
      %p263 = scmp.eq.s32.totalorder %s30, 0
      %p264 = por %p262, %p263
      %p265 = scmp.ne.s32.totalorder %s253, %s254
      %p266 = scmp.eq.s32.totalorder %s31, 3
      %p267 = por %p265, %p266
      %p269 = scmp.ne.s32.totalorder %s254, %s268
      %p270 = scmp.eq.s32.totalorder %s31, 0
      %p271 = por %p269, %p270
      %s273 = sadd.s32 %s272, 1
      %p276 = scmp.eq.s32.totalorder %s25, 3
      %p277 = scmp.ne.s32.totalorder %s272, %s274
      %p278 = scmp.eq.s32.totalorder %s25, 0
      %p279 = por %p277, %p278
      %p280 = scmp.ne.s32.totalorder %s272, %s274
      %p281 = scmp.eq.s32.totalorder %s30, 3
      %p282 = por %p280, %p281
      %p283 = scmp.ne.s32.totalorder %s274, %s275
      %p284 = scmp.eq.s32.totalorder %s30, 0
      %p285 = por %p283, %p284
      %p286 = scmp.ne.s32.totalorder %s274, %s275
      %p287 = scmp.eq.s32.totalorder %s31, 3
      %p288 = por %p286, %p287
      %p290 = scmp.ne.s32.totalorder %s275, %s289
      %p291 = scmp.eq.s32.totalorder %s31, 0
      %p292 = por %p290, %p291
      %s294 = sadd.s32 %s293, 1
      %p297 = scmp.eq.s32.totalorder %s25, 3
      %p298 = scmp.ne.s32.totalorder %s293, %s295
      %p299 = scmp.eq.s32.totalorder %s25, 0
      %p300 = por %p298, %p299
      %p301 = scmp.ne.s32.totalorder %s293, %s295
      %p302 = scmp.eq.s32.totalorder %s30, 3
      %p303 = por %p301, %p302
      %p304 = scmp.ne.s32.totalorder %s295, %s296
      %p305 = scmp.eq.s32.totalorder %s30, 0
      %p306 = por %p304, %p305
      %p307 = scmp.ne.s32.totalorder %s295, %s296
      %p308 = scmp.eq.s32.totalorder %s31, 3
      %p309 = por %p307, %p308
      %p311 = scmp.ne.s32.totalorder %s296, %s310
      %p312 = scmp.eq.s32.totalorder %s31, 0
      %p313 = por %p311, %p312
      %s315 = sadd.s32 %s314, 1
      %p318 = scmp.eq.s32.totalorder %s25, 3
      %p319 = scmp.ne.s32.totalorder %s314, %s316
      %p320 = scmp.eq.s32.totalorder %s25, 0
      %p321 = por %p319, %p320
      %p322 = scmp.ne.s32.totalorder %s314, %s316
      %p323 = scmp.eq.s32.totalorder %s30, 3
      %p324 = por %p322, %p323
      %p325 = scmp.ne.s32.totalorder %s316, %s317
      %p326 = scmp.eq.s32.totalorder %s30, 0
      %p327 = por %p325, %p326
      %p328 = scmp.ne.s32.totalorder %s316, %s317
      %p329 = scmp.eq.s32.totalorder %s31, 3
      %p330 = por %p328, %p329
      %p332 = scmp.ne.s32.totalorder %s317, %s331
      %p333 = scmp.eq.s32.totalorder %s31, 0
      %p334 = por %p332, %p333
      %s336 = sadd.s32 %s335, 1
      %p339 = scmp.eq.s32.totalorder %s25, 3
      %p340 = scmp.ne.s32.totalorder %s335, %s337
      %p341 = scmp.eq.s32.totalorder %s25, 0
      %p342 = por %p340, %p341
      %p343 = scmp.ne.s32.totalorder %s335, %s337
      %p344 = scmp.eq.s32.totalorder %s30, 3
      %p345 = por %p343, %p344
      %p346 = scmp.ne.s32.totalorder %s337, %s338
      %p347 = scmp.eq.s32.totalorder %s30, 0
      %p348 = por %p346, %p347
      %p349 = scmp.ne.s32.totalorder %s337, %s338
      %p350 = scmp.eq.s32.totalorder %s31, 3
      %p351 = por %p349, %p350
      %p353 = scmp.ne.s32.totalorder %s338, %s352
      %p354 = scmp.eq.s32.totalorder %s31, 0
      %p355 = por %p353, %p354
      %s356 = ssub.s32 %s32, %s44
      %p357 = scmp.eq.s32.totalorder %s356, 0
      %s359 = sadd.s32 %s358, 1
      %s360 = scalar_select %p357, %s358, %s359
      %p363 = pneg %p357
      %p364 = scmp.eq.s32.totalorder %s25, 3
      %p365 = por %p363, %p364
      %p366 = scmp.ne.s32.totalorder %s358, %s361
      %p367 = scmp.eq.s32.totalorder %s25, 0
      %p368 = por %p366, %p367
      %p369 = scmp.ne.s32.totalorder %s358, %s361
      %p370 = scmp.eq.s32.totalorder %s30, 3
      %p371 = por %p369, %p370
      %p372 = scmp.ne.s32.totalorder %s361, %s362
      %p373 = scmp.eq.s32.totalorder %s30, 0
      %p374 = por %p372, %p373
      %p375 = scmp.ne.s32.totalorder %s361, %s362
      %p376 = scmp.eq.s32.totalorder %s31, 3
      %p377 = por %p375, %p376
      %p379 = scmp.ne.s32.totalorder %s362, %s378
      %p380 = scmp.eq.s32.totalorder %s31, 0
      %p381 = por %p379, %p380
      %p382 = scmp.le.s32.totalorder 1, %s25
      %p383 = scmp.lt.s32.totalorder %s25, 5
      %p384 = pnand %p382, %p383
      %p385 = pneg %p384
      // Predicated region
      $region9: #{tpu_custom_call.1} parent=5 // pred_check
        _
      $region10: #{tpu_custom_call.1} parent=5 // pred_check_branch
        %387 = sbr.rel (%p384) target = $region12
      $region11: #{tpu_custom_call.1} parent=5 // pred_region
        %s388 = ssub.s32 %s25, 1
        // Predicated region
        $region13: #{tpu_custom_call.1} parent=11 // pred_check
          %p389 = pneg %p222
        $region14: #{tpu_custom_call.1} parent=11 // pred_check_branch
          %391 = sbr.rel (%p389) target = $region16
        $region15: #{tpu_custom_call.1} parent=11 // pred_region
          %s393 = ssub.s32 2048, 2048
          %394 = vsyncadd [#allocation9], %s393
          %s395 = sshll.u32 [#allocation8], 4
          %s396 = int_to_ptr.vmem [resolvable:$true] %s395
          %401 = dma.hbm_to_vmem [thread:$0]  %s6, 2048, %s396, [#allocation9], 128, 128, 8
        $region16: #{tpu_custom_call.1} parent=11 // pred_fallthru
          _
        // Predicated region
        $region17: #{tpu_custom_call.1} parent=11 // pred_check
          %p402 = pneg %p243
        $region18: #{tpu_custom_call.1} parent=11 // pred_check_branch
          %404 = sbr.rel (%p402) target = $region20
        $region19: #{tpu_custom_call.1} parent=11 // pred_region
          %s406 = ssub.s32 2048, 2048
          %407 = vsyncadd [#allocation12], %s406
          %s408 = sshll.u32 [#allocation11], 4
          %s409 = int_to_ptr.vmem [resolvable:$true] %s408
          %414 = dma.hbm_to_vmem [thread:$0]  %s7, 2048, %s409, [#allocation12], 128, 128, 8
        $region20: #{tpu_custom_call.1} parent=11 // pred_fallthru
          _
        // Predicated region
        $region21: #{tpu_custom_call.1} parent=11 // pred_check
          %p415 = pneg %p264
        $region22: #{tpu_custom_call.1} parent=11 // pred_check_branch
          %417 = sbr.rel (%p415) target = $region24
        $region23: #{tpu_custom_call.1} parent=11 // pred_region
          %s419 = ssub.s32 2048, 2048
          %420 = vsyncadd [#allocation12], %s419
          %s421 = sshll.u32 [#allocation13], 4
          %s422 = int_to_ptr.vmem [resolvable:$true] %s421
          %427 = dma.hbm_to_vmem [thread:$0]  %s8, 2048, %s422, [#allocation12], 128, 128, 8
        $region24: #{tpu_custom_call.1} parent=11 // pred_fallthru
          _
        // Predicated region
        $region25: #{tpu_custom_call.1} parent=11 // pred_check
          %p428 = pneg %p285
        $region26: #{tpu_custom_call.1} parent=11 // pred_check_branch
          %430 = sbr.rel (%p428) target = $region28
        $region27: #{tpu_custom_call.1} parent=11 // pred_region
          %s432 = ssub.s32 2048, 2048
          %433 = vsyncadd [#allocation15], %s432
          %s434 = sshll.u32 [#allocation14], 4
          %s435 = int_to_ptr.vmem [resolvable:$true] %s434
          %440 = dma.hbm_to_vmem [thread:$0]  %s9, 2048, %s435, [#allocation15], 128, 128, 8
        $region28: #{tpu_custom_call.1} parent=11 // pred_fallthru
          _
        // Predicated region
        $region29: #{tpu_custom_call.1} parent=11 // pred_check
          %p441 = pneg %p306
        $region30: #{tpu_custom_call.1} parent=11 // pred_check_branch
          %443 = sbr.rel (%p441) target = $region32
        $region31: #{tpu_custom_call.1} parent=11 // pred_region
          _
        $region32: #{tpu_custom_call.1} parent=11 // pred_fallthru
          _
        // Predicated region
        $region33: #{tpu_custom_call.1} parent=11 // pred_check
          %p444 = pneg %p327
        $region34: #{tpu_custom_call.1} parent=11 // pred_check_branch
          %446 = sbr.rel (%p444) target = $region36
        $region35: #{tpu_custom_call.1} parent=11 // pred_region
          %s448 = ssub.s32 2048, 2048
          %449 = vsyncadd [#allocation15], %s448
          %s450 = sshll.u32 [#allocation16], 4
          %s451 = int_to_ptr.vmem [resolvable:$true] %s450
          %456 = dma.hbm_to_vmem [thread:$0]  %s11, 2048, %s451, [#allocation15], 128, 128, 8
        $region36: #{tpu_custom_call.1} parent=11 // pred_fallthru
          _
        // Predicated region
        $region37: #{tpu_custom_call.1} parent=11 // pred_check
          %p457 = pneg %p348
        $region38: #{tpu_custom_call.1} parent=11 // pred_check_branch
          %459 = sbr.rel (%p457) target = $region40
        $region39: #{tpu_custom_call.1} parent=11 // pred_region
          _
        $region40: #{tpu_custom_call.1} parent=11 // pred_fallthru
          _
      $region12: #{tpu_custom_call.1} parent=5 // pred_fallthru
        _
      %p460 = scmp.lt.s32.totalorder %s25, 4
      // Predicated region
      $region41: #{tpu_custom_call.1} parent=5 // pred_check
        %p461 = pneg %p460
      $region42: #{tpu_custom_call.1} parent=5 // pred_check_branch
        %463 = sbr.rel (%p461) target = $region44
      $region43: #{tpu_custom_call.1} parent=5 // pred_region
        // Predicated region
        $region45: #{tpu_custom_call.1} parent=43 // pred_check
          %p464 = pneg %p59
        $region46: #{tpu_custom_call.1} parent=43 // pred_check_branch
          %466 = sbr.rel (%p464) target = $region48
        $region47: #{tpu_custom_call.1} parent=43 // pred_region
          %s467 = sand.u32 %s49, 1
          %s468 = sand.u32 %s49, 1
          %s469 = smul.addr %s468, 64
          %s470 = scalar_lea.vmem [#allocation4], %s469
          %s471 = smul.u32 8, %s32
          %s472 = smul.addr %s471, 2
          %s473 = sadd.s32 %s33, %s472
          %s474 = smul.addr %s473, 8
          %s475 = scalar_lea.vmem %s0, %s474
          // Predicated region
          $region49: #{tpu_custom_call.1} parent=47 // pred_check
            _
          $region50: #{tpu_custom_call.1} parent=47 // pred_check_branch
            %477 = sbr.rel (0) target = $region52
          $region51: #{tpu_custom_call.1} parent=47 // pred_region
            // Predicated region
            $region53: #{tpu_custom_call.1} parent=51 // pred_check
              _
            $region54: #{tpu_custom_call.1} parent=51 // pred_check_branch
              %479 = sbr.rel (0) target = $region56
            $region55: #{tpu_custom_call.1} parent=51 // pred_region
              // Predicated region
              $region68: #{tpu_custom_call.1} parent=55 // pred_check
                _
              $region69: #{tpu_custom_call.1} parent=55 // pred_check_branch
                %508 = sbr.rel (0) target = $region71
              $region70: #{tpu_custom_call.1} parent=55 // pred_region
                loop: start=0, step=1, limit=1
                $region72: #{tpu_custom_call.1} parent=70 // loop_pre_header
                  _
                $region73: #{tpu_custom_call.1} parent=70 // loop_header
                  %s510 = sphi 0, %s514
                  %p511 = scmp.ge.s32.totalorder %s510, 1
                  %s515 = sphi %s475, %s475
                  %s516 = sphi %s470, %s470
                $region74: #{tpu_custom_call.1} parent=70 // loop_header_branch
                  %513 = sbr.rel (%p511) target = $region78
                $region75: #{tpu_custom_call.1} parent=70 // loop_body
                  %v517 = vld [vmem:[%s515] sm:$0xff]
                  %518 = vst [vmem:[%s516] sm:$0xff] %v517
                  %v519 = vld [vmem:[%s515 + $0x10] sm:$0xff]
                  %520 = vst [vmem:[%s516 + $0x8] sm:$0xff] %v519
                  %v521 = vld [vmem:[%s515 + $0x20] sm:$0xff]
                  %522 = vst [vmem:[%s516 + $0x10] sm:$0xff] %v521
                  %v523 = vld [vmem:[%s515 + $0x30] sm:$0xff]
                  %524 = vst [vmem:[%s516 + $0x18] sm:$0xff] %v523
                  %v525 = vld [vmem:[%s515 + $0x40] sm:$0xff]
                  %526 = vst [vmem:[%s516 + $0x20] sm:$0xff] %v525
                  %v527 = vld [vmem:[%s515 + $0x50] sm:$0xff]
                  %528 = vst [vmem:[%s516 + $0x28] sm:$0xff] %v527
                  %v529 = vld [vmem:[%s515 + $0x60] sm:$0xff]
                  %530 = vst [vmem:[%s516 + $0x30] sm:$0xff] %v529
                  %v531 = vld [vmem:[%s515 + $0x70] sm:$0xff]
                  %532 = vst [vmem:[%s516 + $0x38] sm:$0xff] %v531
                $region76: #{tpu_custom_call.1} parent=70 // loop_footer
                  %s514 = sadd.s32 1, %s510
                $region77: #{tpu_custom_call.1} parent=70 // loop_footer_branch
                  %509 = sbr.rel target = $region73
                $region78: #{tpu_custom_call.1} parent=70 // loop_exit
                  _
              $region71: #{tpu_custom_call.1} parent=55 // pred_fallthru
                _
              // Predicated region
              $region79: #{tpu_custom_call.1} parent=55 // pred_check
                _
              $region80: #{tpu_custom_call.1} parent=55 // pred_check_branch
                %534 = sbr.rel target = $region82
              $region81: #{tpu_custom_call.1} parent=55 // pred_region
                _
              $region82: #{tpu_custom_call.1} parent=55 // pred_fallthru
                _
            $region56: #{tpu_custom_call.1} parent=51 // pred_fallthru
              _
            // Predicated region
            $region57: #{tpu_custom_call.1} parent=51 // pred_check
              _
            $region58: #{tpu_custom_call.1} parent=51 // pred_check_branch
              %481 = sbr.rel target = $region60
            $region59: #{tpu_custom_call.1} parent=51 // pred_region
              loop: start=0, step=1, limit=1
              $region61: #{tpu_custom_call.1} parent=59 // loop_pre_header
                _
              $region62: #{tpu_custom_call.1} parent=59 // loop_header
                %s484 = sphi 0, %s488
                %p485 = scmp.ge.s32.totalorder %s484, 1
                %s489 = sphi %s475, %s475
                %s490 = sphi %s470, %s470
              $region63: #{tpu_custom_call.1} parent=59 // loop_header_branch
                %487 = sbr.rel (%p485) target = $region67
              $region64: #{tpu_custom_call.1} parent=59 // loop_body
                %v491 = vld [vmem:[%s489] sm:$0xff]
                %492 = vst [vmem:[%s490] sm:$0xff] %v491
                %v493 = vld [vmem:[%s489 + $0x10] sm:$0xff]
                %494 = vst [vmem:[%s490 + $0x8] sm:$0xff] %v493
                %v495 = vld [vmem:[%s489 + $0x20] sm:$0xff]
                %496 = vst [vmem:[%s490 + $0x10] sm:$0xff] %v495
                %v497 = vld [vmem:[%s489 + $0x30] sm:$0xff]
                %498 = vst [vmem:[%s490 + $0x18] sm:$0xff] %v497
                %v499 = vld [vmem:[%s489 + $0x40] sm:$0xff]
                %500 = vst [vmem:[%s490 + $0x20] sm:$0xff] %v499
                %v501 = vld [vmem:[%s489 + $0x50] sm:$0xff]
                %502 = vst [vmem:[%s490 + $0x28] sm:$0xff] %v501
                %v503 = vld [vmem:[%s489 + $0x60] sm:$0xff]
                %504 = vst [vmem:[%s490 + $0x30] sm:$0xff] %v503
                %v505 = vld [vmem:[%s489 + $0x70] sm:$0xff]
                %506 = vst [vmem:[%s490 + $0x38] sm:$0xff] %v505
              $region65: #{tpu_custom_call.1} parent=59 // loop_footer
                %s488 = sadd.s32 1, %s484
              $region66: #{tpu_custom_call.1} parent=59 // loop_footer_branch
                %483 = sbr.rel target = $region62
              $region67: #{tpu_custom_call.1} parent=59 // loop_exit
                _
            $region60: #{tpu_custom_call.1} parent=51 // pred_fallthru
              _
          $region52: #{tpu_custom_call.1} parent=47 // pred_fallthru
            _
          %535 = vnop
        $region48: #{tpu_custom_call.1} parent=43 // pred_fallthru
          _
        // Predicated region
        $region83: #{tpu_custom_call.1} parent=43 // pred_check
          %p536 = pneg %p87
        $region84: #{tpu_custom_call.1} parent=43 // pred_check_branch
          %538 = sbr.rel (%p536) target = $region86
        $region85: #{tpu_custom_call.1} parent=43 // pred_region
          %s539 = sand.u32 %s77, 1
          %s540 = sand.u32 %s77, 1
          %s541 = smul.addr %s540, 64
          %s542 = scalar_lea.vmem [#allocation5], %s541
          %s543 = smul.u32 8, %s32
          %s544 = smul.addr %s543, 2
          %s545 = sadd.s32 %s33, %s544
          %s546 = smul.addr %s545, 8
          %s547 = scalar_lea.vmem %s1, %s546
          // Predicated region
          $region87: #{tpu_custom_call.1} parent=85 // pred_check
            _
          $region88: #{tpu_custom_call.1} parent=85 // pred_check_branch
            %549 = sbr.rel (0) target = $region90
          $region89: #{tpu_custom_call.1} parent=85 // pred_region
            // Predicated region
            $region91: #{tpu_custom_call.1} parent=89 // pred_check
              _
            $region92: #{tpu_custom_call.1} parent=89 // pred_check_branch
              %551 = sbr.rel (0) target = $region94
            $region93: #{tpu_custom_call.1} parent=89 // pred_region
              // Predicated region
              $region106: #{tpu_custom_call.1} parent=93 // pred_check
                _
              $region107: #{tpu_custom_call.1} parent=93 // pred_check_branch
                %580 = sbr.rel (0) target = $region109
              $region108: #{tpu_custom_call.1} parent=93 // pred_region
                loop: start=0, step=1, limit=1
                $region110: #{tpu_custom_call.1} parent=108 // loop_pre_header
                  _
                $region111: #{tpu_custom_call.1} parent=108 // loop_header
                  %s582 = sphi 0, %s586
                  %p583 = scmp.ge.s32.totalorder %s582, 1
                  %s587 = sphi %s547, %s547
                  %s588 = sphi %s542, %s542
                $region112: #{tpu_custom_call.1} parent=108 // loop_header_branch
                  %585 = sbr.rel (%p583) target = $region116
                $region113: #{tpu_custom_call.1} parent=108 // loop_body
                  %v589 = vld [vmem:[%s587] sm:$0xff]
                  %590 = vst [vmem:[%s588] sm:$0xff] %v589
                  %v591 = vld [vmem:[%s587 + $0x10] sm:$0xff]
                  %592 = vst [vmem:[%s588 + $0x8] sm:$0xff] %v591
                  %v593 = vld [vmem:[%s587 + $0x20] sm:$0xff]
                  %594 = vst [vmem:[%s588 + $0x10] sm:$0xff] %v593
                  %v595 = vld [vmem:[%s587 + $0x30] sm:$0xff]
                  %596 = vst [vmem:[%s588 + $0x18] sm:$0xff] %v595
                  %v597 = vld [vmem:[%s587 + $0x40] sm:$0xff]
                  %598 = vst [vmem:[%s588 + $0x20] sm:$0xff] %v597
                  %v599 = vld [vmem:[%s587 + $0x50] sm:$0xff]
                  %600 = vst [vmem:[%s588 + $0x28] sm:$0xff] %v599
                  %v601 = vld [vmem:[%s587 + $0x60] sm:$0xff]
                  %602 = vst [vmem:[%s588 + $0x30] sm:$0xff] %v601
                  %v603 = vld [vmem:[%s587 + $0x70] sm:$0xff]
                  %604 = vst [vmem:[%s588 + $0x38] sm:$0xff] %v603
                $region114: #{tpu_custom_call.1} parent=108 // loop_footer
                  %s586 = sadd.s32 1, %s582
                $region115: #{tpu_custom_call.1} parent=108 // loop_footer_branch
                  %581 = sbr.rel target = $region111
                $region116: #{tpu_custom_call.1} parent=108 // loop_exit
                  _
              $region109: #{tpu_custom_call.1} parent=93 // pred_fallthru
                _
              // Predicated region
              $region117: #{tpu_custom_call.1} parent=93 // pred_check
                _
              $region118: #{tpu_custom_call.1} parent=93 // pred_check_branch
                %606 = sbr.rel target = $region120
              $region119: #{tpu_custom_call.1} parent=93 // pred_region
                _
              $region120: #{tpu_custom_call.1} parent=93 // pred_fallthru
                _
            $region94: #{tpu_custom_call.1} parent=89 // pred_fallthru
              _
            // Predicated region
            $region95: #{tpu_custom_call.1} parent=89 // pred_check
              _
            $region96: #{tpu_custom_call.1} parent=89 // pred_check_branch
              %553 = sbr.rel target = $region98
            $region97: #{tpu_custom_call.1} parent=89 // pred_region
              loop: start=0, step=1, limit=1
              $region99: #{tpu_custom_call.1} parent=97 // loop_pre_header
                _
              $region100: #{tpu_custom_call.1} parent=97 // loop_header
                %s556 = sphi 0, %s560
                %p557 = scmp.ge.s32.totalorder %s556, 1
                %s561 = sphi %s547, %s547
                %s562 = sphi %s542, %s542
              $region101: #{tpu_custom_call.1} parent=97 // loop_header_branch
                %559 = sbr.rel (%p557) target = $region105
              $region102: #{tpu_custom_call.1} parent=97 // loop_body
                %v563 = vld [vmem:[%s561] sm:$0xff]
                %564 = vst [vmem:[%s562] sm:$0xff] %v563
                %v565 = vld [vmem:[%s561 + $0x10] sm:$0xff]
                %566 = vst [vmem:[%s562 + $0x8] sm:$0xff] %v565
                %v567 = vld [vmem:[%s561 + $0x20] sm:$0xff]
                %568 = vst [vmem:[%s562 + $0x10] sm:$0xff] %v567
                %v569 = vld [vmem:[%s561 + $0x30] sm:$0xff]
                %570 = vst [vmem:[%s562 + $0x18] sm:$0xff] %v569
                %v571 = vld [vmem:[%s561 + $0x40] sm:$0xff]
                %572 = vst [vmem:[%s562 + $0x20] sm:$0xff] %v571
                %v573 = vld [vmem:[%s561 + $0x50] sm:$0xff]
                %574 = vst [vmem:[%s562 + $0x28] sm:$0xff] %v573
                %v575 = vld [vmem:[%s561 + $0x60] sm:$0xff]
                %576 = vst [vmem:[%s562 + $0x30] sm:$0xff] %v575
                %v577 = vld [vmem:[%s561 + $0x70] sm:$0xff]
                %578 = vst [vmem:[%s562 + $0x38] sm:$0xff] %v577
              $region103: #{tpu_custom_call.1} parent=97 // loop_footer
                %s560 = sadd.s32 1, %s556
              $region104: #{tpu_custom_call.1} parent=97 // loop_footer_branch
                %555 = sbr.rel target = $region100
              $region105: #{tpu_custom_call.1} parent=97 // loop_exit
                _
            $region98: #{tpu_custom_call.1} parent=89 // pred_fallthru
              _
          $region90: #{tpu_custom_call.1} parent=85 // pred_fallthru
            _
          %607 = vnop
        $region86: #{tpu_custom_call.1} parent=43 // pred_fallthru
          _
        // Predicated region
        $region121: #{tpu_custom_call.1} parent=43 // pred_check
          %p608 = pneg %p115
        $region122: #{tpu_custom_call.1} parent=43 // pred_check_branch
          %610 = sbr.rel (%p608) target = $region124
        $region123: #{tpu_custom_call.1} parent=43 // pred_region
          %s611 = sand.u32 %s105, 1
          %s612 = sand.u32 %s105, 1
          %s613 = smul.addr %s612, 64
          %s614 = scalar_lea.vmem [#allocation6], %s613
          %s615 = smul.u32 8, %s32
          %s616 = smul.addr %s615, 2
          %s617 = sadd.s32 %s33, %s616
          %s618 = smul.addr %s617, 8
          %s619 = scalar_lea.vmem %s2, %s618
          // Predicated region
          $region125: #{tpu_custom_call.1} parent=123 // pred_check
            _
          $region126: #{tpu_custom_call.1} parent=123 // pred_check_branch
            %621 = sbr.rel (0) target = $region128
          $region127: #{tpu_custom_call.1} parent=123 // pred_region
            // Predicated region
            $region129: #{tpu_custom_call.1} parent=127 // pred_check
              _
            $region130: #{tpu_custom_call.1} parent=127 // pred_check_branch
              %623 = sbr.rel (0) target = $region132
            $region131: #{tpu_custom_call.1} parent=127 // pred_region
              // Predicated region
              $region144: #{tpu_custom_call.1} parent=131 // pred_check
                _
              $region145: #{tpu_custom_call.1} parent=131 // pred_check_branch
                %652 = sbr.rel (0) target = $region147
              $region146: #{tpu_custom_call.1} parent=131 // pred_region
                loop: start=0, step=1, limit=1
                $region148: #{tpu_custom_call.1} parent=146 // loop_pre_header
                  _
                $region149: #{tpu_custom_call.1} parent=146 // loop_header
                  %s654 = sphi 0, %s658
                  %p655 = scmp.ge.s32.totalorder %s654, 1
                  %s659 = sphi %s619, %s619
                  %s660 = sphi %s614, %s614
                $region150: #{tpu_custom_call.1} parent=146 // loop_header_branch
                  %657 = sbr.rel (%p655) target = $region154
                $region151: #{tpu_custom_call.1} parent=146 // loop_body
                  %v661 = vld [vmem:[%s659] sm:$0xff]
                  %662 = vst [vmem:[%s660] sm:$0xff] %v661
                  %v663 = vld [vmem:[%s659 + $0x10] sm:$0xff]
                  %664 = vst [vmem:[%s660 + $0x8] sm:$0xff] %v663
                  %v665 = vld [vmem:[%s659 + $0x20] sm:$0xff]
                  %666 = vst [vmem:[%s660 + $0x10] sm:$0xff] %v665
                  %v667 = vld [vmem:[%s659 + $0x30] sm:$0xff]
                  %668 = vst [vmem:[%s660 + $0x18] sm:$0xff] %v667
                  %v669 = vld [vmem:[%s659 + $0x40] sm:$0xff]
                  %670 = vst [vmem:[%s660 + $0x20] sm:$0xff] %v669
                  %v671 = vld [vmem:[%s659 + $0x50] sm:$0xff]
                  %672 = vst [vmem:[%s660 + $0x28] sm:$0xff] %v671
                  %v673 = vld [vmem:[%s659 + $0x60] sm:$0xff]
                  %674 = vst [vmem:[%s660 + $0x30] sm:$0xff] %v673
                  %v675 = vld [vmem:[%s659 + $0x70] sm:$0xff]
                  %676 = vst [vmem:[%s660 + $0x38] sm:$0xff] %v675
                $region152: #{tpu_custom_call.1} parent=146 // loop_footer
                  %s658 = sadd.s32 1, %s654
                $region153: #{tpu_custom_call.1} parent=146 // loop_footer_branch
                  %653 = sbr.rel target = $region149
                $region154: #{tpu_custom_call.1} parent=146 // loop_exit
                  _
              $region147: #{tpu_custom_call.1} parent=131 // pred_fallthru
                _
              // Predicated region
              $region155: #{tpu_custom_call.1} parent=131 // pred_check
                _
              $region156: #{tpu_custom_call.1} parent=131 // pred_check_branch
                %678 = sbr.rel target = $region158
              $region157: #{tpu_custom_call.1} parent=131 // pred_region
                _
              $region158: #{tpu_custom_call.1} parent=131 // pred_fallthru
                _
            $region132: #{tpu_custom_call.1} parent=127 // pred_fallthru
              _
            // Predicated region
            $region133: #{tpu_custom_call.1} parent=127 // pred_check
              _
            $region134: #{tpu_custom_call.1} parent=127 // pred_check_branch
              %625 = sbr.rel target = $region136
            $region135: #{tpu_custom_call.1} parent=127 // pred_region
              loop: start=0, step=1, limit=1
              $region137: #{tpu_custom_call.1} parent=135 // loop_pre_header
                _
              $region138: #{tpu_custom_call.1} parent=135 // loop_header
                %s628 = sphi 0, %s632
                %p629 = scmp.ge.s32.totalorder %s628, 1
                %s633 = sphi %s619, %s619
                %s634 = sphi %s614, %s614
              $region139: #{tpu_custom_call.1} parent=135 // loop_header_branch
                %631 = sbr.rel (%p629) target = $region143
              $region140: #{tpu_custom_call.1} parent=135 // loop_body
                %v635 = vld [vmem:[%s633] sm:$0xff]
                %636 = vst [vmem:[%s634] sm:$0xff] %v635
                %v637 = vld [vmem:[%s633 + $0x10] sm:$0xff]
                %638 = vst [vmem:[%s634 + $0x8] sm:$0xff] %v637
                %v639 = vld [vmem:[%s633 + $0x20] sm:$0xff]
                %640 = vst [vmem:[%s634 + $0x10] sm:$0xff] %v639
                %v641 = vld [vmem:[%s633 + $0x30] sm:$0xff]
                %642 = vst [vmem:[%s634 + $0x18] sm:$0xff] %v641
                %v643 = vld [vmem:[%s633 + $0x40] sm:$0xff]
                %644 = vst [vmem:[%s634 + $0x20] sm:$0xff] %v643
                %v645 = vld [vmem:[%s633 + $0x50] sm:$0xff]
                %646 = vst [vmem:[%s634 + $0x28] sm:$0xff] %v645
                %v647 = vld [vmem:[%s633 + $0x60] sm:$0xff]
                %648 = vst [vmem:[%s634 + $0x30] sm:$0xff] %v647
                %v649 = vld [vmem:[%s633 + $0x70] sm:$0xff]
                %650 = vst [vmem:[%s634 + $0x38] sm:$0xff] %v649
              $region141: #{tpu_custom_call.1} parent=135 // loop_footer
                %s632 = sadd.s32 1, %s628
              $region142: #{tpu_custom_call.1} parent=135 // loop_footer_branch
                %627 = sbr.rel target = $region138
              $region143: #{tpu_custom_call.1} parent=135 // loop_exit
                _
            $region136: #{tpu_custom_call.1} parent=127 // pred_fallthru
              _
          $region128: #{tpu_custom_call.1} parent=123 // pred_fallthru
            _
          %679 = vnop
        $region124: #{tpu_custom_call.1} parent=43 // pred_fallthru
          _
        // Predicated region
        $region159: #{tpu_custom_call.1} parent=43 // pred_check
          %p680 = pneg %p143
        $region160: #{tpu_custom_call.1} parent=43 // pred_check_branch
          %682 = sbr.rel (%p680) target = $region162
        $region161: #{tpu_custom_call.1} parent=43 // pred_region
          %s683 = sand.u32 %s133, 1
          %s684 = sand.u32 %s133, 1
          %s685 = smul.addr %s684, 64
          %s686 = scalar_lea.vmem [#allocation7], %s685
          %s687 = smul.u32 8, %s32
          %s688 = smul.addr %s687, 2
          %s689 = sadd.s32 %s33, %s688
          %s690 = smul.addr %s689, 8
          %s691 = scalar_lea.vmem %s3, %s690
          // Predicated region
          $region163: #{tpu_custom_call.1} parent=161 // pred_check
            _
          $region164: #{tpu_custom_call.1} parent=161 // pred_check_branch
            %693 = sbr.rel (0) target = $region166
          $region165: #{tpu_custom_call.1} parent=161 // pred_region
            // Predicated region
            $region167: #{tpu_custom_call.1} parent=165 // pred_check
              _
            $region168: #{tpu_custom_call.1} parent=165 // pred_check_branch
              %695 = sbr.rel (0) target = $region170
            $region169: #{tpu_custom_call.1} parent=165 // pred_region
              // Predicated region
              $region182: #{tpu_custom_call.1} parent=169 // pred_check
                _
              $region183: #{tpu_custom_call.1} parent=169 // pred_check_branch
                %724 = sbr.rel (0) target = $region185
              $region184: #{tpu_custom_call.1} parent=169 // pred_region
                loop: start=0, step=1, limit=1
                $region186: #{tpu_custom_call.1} parent=184 // loop_pre_header
                  _
                $region187: #{tpu_custom_call.1} parent=184 // loop_header
                  %s726 = sphi 0, %s730
                  %p727 = scmp.ge.s32.totalorder %s726, 1
                  %s731 = sphi %s691, %s691
                  %s732 = sphi %s686, %s686
                $region188: #{tpu_custom_call.1} parent=184 // loop_header_branch
                  %729 = sbr.rel (%p727) target = $region192
                $region189: #{tpu_custom_call.1} parent=184 // loop_body
                  %v733 = vld [vmem:[%s731] sm:$0xff]
                  %734 = vst [vmem:[%s732] sm:$0xff] %v733
                  %v735 = vld [vmem:[%s731 + $0x10] sm:$0xff]
                  %736 = vst [vmem:[%s732 + $0x8] sm:$0xff] %v735
                  %v737 = vld [vmem:[%s731 + $0x20] sm:$0xff]
                  %738 = vst [vmem:[%s732 + $0x10] sm:$0xff] %v737
                  %v739 = vld [vmem:[%s731 + $0x30] sm:$0xff]
                  %740 = vst [vmem:[%s732 + $0x18] sm:$0xff] %v739
                  %v741 = vld [vmem:[%s731 + $0x40] sm:$0xff]
                  %742 = vst [vmem:[%s732 + $0x20] sm:$0xff] %v741
                  %v743 = vld [vmem:[%s731 + $0x50] sm:$0xff]
                  %744 = vst [vmem:[%s732 + $0x28] sm:$0xff] %v743
                  %v745 = vld [vmem:[%s731 + $0x60] sm:$0xff]
                  %746 = vst [vmem:[%s732 + $0x30] sm:$0xff] %v745
                  %v747 = vld [vmem:[%s731 + $0x70] sm:$0xff]
                  %748 = vst [vmem:[%s732 + $0x38] sm:$0xff] %v747
                $region190: #{tpu_custom_call.1} parent=184 // loop_footer
                  %s730 = sadd.s32 1, %s726
                $region191: #{tpu_custom_call.1} parent=184 // loop_footer_branch
                  %725 = sbr.rel target = $region187
                $region192: #{tpu_custom_call.1} parent=184 // loop_exit
                  _
              $region185: #{tpu_custom_call.1} parent=169 // pred_fallthru
                _
              // Predicated region
              $region193: #{tpu_custom_call.1} parent=169 // pred_check
                _
              $region194: #{tpu_custom_call.1} parent=169 // pred_check_branch
                %750 = sbr.rel target = $region196
              $region195: #{tpu_custom_call.1} parent=169 // pred_region
                _
              $region196: #{tpu_custom_call.1} parent=169 // pred_fallthru
                _
            $region170: #{tpu_custom_call.1} parent=165 // pred_fallthru
              _
            // Predicated region
            $region171: #{tpu_custom_call.1} parent=165 // pred_check
              _
            $region172: #{tpu_custom_call.1} parent=165 // pred_check_branch
              %697 = sbr.rel target = $region174
            $region173: #{tpu_custom_call.1} parent=165 // pred_region
              loop: start=0, step=1, limit=1
              $region175: #{tpu_custom_call.1} parent=173 // loop_pre_header
                _
              $region176: #{tpu_custom_call.1} parent=173 // loop_header
                %s700 = sphi 0, %s704
                %p701 = scmp.ge.s32.totalorder %s700, 1
                %s705 = sphi %s691, %s691
                %s706 = sphi %s686, %s686
              $region177: #{tpu_custom_call.1} parent=173 // loop_header_branch
                %703 = sbr.rel (%p701) target = $region181
              $region178: #{tpu_custom_call.1} parent=173 // loop_body
                %v707 = vld [vmem:[%s705] sm:$0xff]
                %708 = vst [vmem:[%s706] sm:$0xff] %v707
                %v709 = vld [vmem:[%s705 + $0x10] sm:$0xff]
                %710 = vst [vmem:[%s706 + $0x8] sm:$0xff] %v709
                %v711 = vld [vmem:[%s705 + $0x20] sm:$0xff]
                %712 = vst [vmem:[%s706 + $0x10] sm:$0xff] %v711
                %v713 = vld [vmem:[%s705 + $0x30] sm:$0xff]
                %714 = vst [vmem:[%s706 + $0x18] sm:$0xff] %v713
                %v715 = vld [vmem:[%s705 + $0x40] sm:$0xff]
                %716 = vst [vmem:[%s706 + $0x20] sm:$0xff] %v715
                %v717 = vld [vmem:[%s705 + $0x50] sm:$0xff]
                %718 = vst [vmem:[%s706 + $0x28] sm:$0xff] %v717
                %v719 = vld [vmem:[%s705 + $0x60] sm:$0xff]
                %720 = vst [vmem:[%s706 + $0x30] sm:$0xff] %v719
                %v721 = vld [vmem:[%s705 + $0x70] sm:$0xff]
                %722 = vst [vmem:[%s706 + $0x38] sm:$0xff] %v721
              $region179: #{tpu_custom_call.1} parent=173 // loop_footer
                %s704 = sadd.s32 1, %s700
              $region180: #{tpu_custom_call.1} parent=173 // loop_footer_branch
                %699 = sbr.rel target = $region176
              $region181: #{tpu_custom_call.1} parent=173 // loop_exit
                _
            $region174: #{tpu_custom_call.1} parent=165 // pred_fallthru
              _
          $region166: #{tpu_custom_call.1} parent=161 // pred_fallthru
            _
          %751 = vnop
        $region162: #{tpu_custom_call.1} parent=43 // pred_fallthru
          _
        // Predicated region
        $region197: #{tpu_custom_call.1} parent=43 // pred_check
          %p752 = pneg %p169
        $region198: #{tpu_custom_call.1} parent=43 // pred_check_branch
          %754 = sbr.rel (%p752) target = $region200
        $region199: #{tpu_custom_call.1} parent=43 // pred_region
          %p755 = scmp.lt.s32.totalorder %s32, 1
          %s756 = scalar_select %p755, %s32, 1
          %s757 = smul.addr %s756, 8
          %s758 = scalar_lea.vmem %s4, %s757
        $region200: #{tpu_custom_call.1} parent=43 // pred_fallthru
          _
        // Predicated region
        $region201: #{tpu_custom_call.1} parent=43 // pred_check
          %p759 = pneg %p195
        $region202: #{tpu_custom_call.1} parent=43 // pred_check_branch
          %761 = sbr.rel (%p759) target = $region204
        $region203: #{tpu_custom_call.1} parent=43 // pred_region
          %p762 = scmp.lt.s32.totalorder %s32, 1
          %s763 = scalar_select %p762, %s32, 1
          %s764 = smul.addr %s763, 8
          %s765 = scalar_lea.vmem %s5, %s764
        $region204: #{tpu_custom_call.1} parent=43 // pred_fallthru
          _
      $region44: #{tpu_custom_call.1} parent=5 // pred_fallthru
        _
      %p766 = scmp.le.s32.totalorder 1, %s25
      %p767 = scmp.lt.s32.totalorder %s25, 5
      %p768 = pnand %p766, %p767
      %p769 = pneg %p768
      // Predicated region
      $region205: #{tpu_custom_call.1} parent=5 // pred_check
        _
      $region206: #{tpu_custom_call.1} parent=5 // pred_check_branch
        %771 = sbr.rel (%p768) target = $region208
      $region207: #{tpu_custom_call.1} parent=5 // pred_region
        %s772 = ssub.s32 %s25, 1
        %s773 = sand.u32 %s52, 1
        %s774 = sand.u32 %s52, 1
        %s775 = smul.addr %s774, 64
        %s776 = scalar_lea.vmem [#allocation4], %s775
        // Predicated region
        $region209: #{tpu_custom_call.1} parent=207 // pred_check
          %p777 = pneg %p65
        $region210: #{tpu_custom_call.1} parent=207 // pred_check_branch
          %779 = sbr.rel (%p777) target = $region212
        $region211: #{tpu_custom_call.1} parent=207 // pred_region
          _
        $region212: #{tpu_custom_call.1} parent=207 // pred_fallthru
          _
        %s780 = sand.u32 %s80, 1
        %s781 = sand.u32 %s80, 1
        %s782 = smul.addr %s781, 64
        %s783 = scalar_lea.vmem [#allocation5], %s782
        // Predicated region
        $region213: #{tpu_custom_call.1} parent=207 // pred_check
          %p784 = pneg %p93
        $region214: #{tpu_custom_call.1} parent=207 // pred_check_branch
          %786 = sbr.rel (%p784) target = $region216
        $region215: #{tpu_custom_call.1} parent=207 // pred_region
          _
        $region216: #{tpu_custom_call.1} parent=207 // pred_fallthru
          _
        %s787 = sand.u32 %s108, 1
        %s788 = sand.u32 %s108, 1
        %s789 = smul.addr %s788, 64
        %s790 = scalar_lea.vmem [#allocation6], %s789
        // Predicated region
        $region217: #{tpu_custom_call.1} parent=207 // pred_check
          %p791 = pneg %p121
        $region218: #{tpu_custom_call.1} parent=207 // pred_check_branch
          %793 = sbr.rel (%p791) target = $region220
        $region219: #{tpu_custom_call.1} parent=207 // pred_region
          _
        $region220: #{tpu_custom_call.1} parent=207 // pred_fallthru
          _
        %s794 = sand.u32 %s136, 1
        %s795 = sand.u32 %s136, 1
        %s796 = smul.addr %s795, 64
        %s797 = scalar_lea.vmem [#allocation7], %s796
        // Predicated region
        $region221: #{tpu_custom_call.1} parent=207 // pred_check
          %p798 = pneg %p149
        $region222: #{tpu_custom_call.1} parent=207 // pred_check_branch
          %800 = sbr.rel (%p798) target = $region224
        $region223: #{tpu_custom_call.1} parent=207 // pred_region
          _
        $region224: #{tpu_custom_call.1} parent=207 // pred_fallthru
          _
        // Predicated region
        $region225: #{tpu_custom_call.1} parent=207 // pred_check
          %p801 = pneg %p222
        $region226: #{tpu_custom_call.1} parent=207 // pred_check_branch
          %803 = sbr.rel (%p801) target = $region228
        $region227: #{tpu_custom_call.1} parent=207 // pred_region
          %804 = dma.done [#allocation9], 2048
        $region228: #{tpu_custom_call.1} parent=207 // pred_fallthru
          _
        // Predicated region
        $region229: #{tpu_custom_call.1} parent=207 // pred_check
          %p805 = pneg %p243
        $region230: #{tpu_custom_call.1} parent=207 // pred_check_branch
          %807 = sbr.rel (%p805) target = $region232
        $region231: #{tpu_custom_call.1} parent=207 // pred_region
          %808 = dma.done [#allocation12], 2048
        $region232: #{tpu_custom_call.1} parent=207 // pred_fallthru
          _
        // Predicated region
        $region233: #{tpu_custom_call.1} parent=207 // pred_check
          %p809 = pneg %p264
        $region234: #{tpu_custom_call.1} parent=207 // pred_check_branch
          %811 = sbr.rel (%p809) target = $region236
        $region235: #{tpu_custom_call.1} parent=207 // pred_region
          %812 = dma.done [#allocation12], 2048
        $region236: #{tpu_custom_call.1} parent=207 // pred_fallthru
          _
        // Predicated region
        $region237: #{tpu_custom_call.1} parent=207 // pred_check
          %p813 = pneg %p285
        $region238: #{tpu_custom_call.1} parent=207 // pred_check_branch
          %815 = sbr.rel (%p813) target = $region240
        $region239: #{tpu_custom_call.1} parent=207 // pred_region
          %816 = dma.done [#allocation15], 2048
        $region240: #{tpu_custom_call.1} parent=207 // pred_fallthru
          _
        // Predicated region
        $region241: #{tpu_custom_call.1} parent=207 // pred_check
          %p817 = pneg %p327
        $region242: #{tpu_custom_call.1} parent=207 // pred_check_branch
          %819 = sbr.rel (%p817) target = $region244
        $region243: #{tpu_custom_call.1} parent=207 // pred_region
          %820 = dma.done [#allocation15], 2048
        $region244: #{tpu_custom_call.1} parent=207 // pred_fallthru
          _
        %s821 = sand.u32 %s52, 1
        %s822 = sand.u32 %s52, 1
        %s823 = smul.addr %s822, 64
        %s824 = scalar_lea.vmem [#allocation4], %s823
        %p825 = pneg %p65
        %p826 = pneg %p62
        %s827 = sand.u32 %s80, 1
        %s828 = sand.u32 %s80, 1
        %s829 = smul.addr %s828, 64
        %s830 = scalar_lea.vmem [#allocation5], %s829
        %p831 = pneg %p93
        %p832 = pneg %p90
        %s833 = sand.u32 %s108, 1
        %s834 = sand.u32 %s108, 1
        %s835 = smul.addr %s834, 64
        %s836 = scalar_lea.vmem [#allocation6], %s835
        %p837 = pneg %p121
        %p838 = pneg %p118
        %s839 = sand.u32 %s136, 1
        %s840 = sand.u32 %s136, 1
        %s841 = smul.addr %s840, 64
        %s842 = scalar_lea.vmem [#allocation7], %s841
        %p843 = pneg %p149
        %p844 = pneg %p146
        %p845 = scmp.lt.s32.totalorder %s34, 1
        %s846 = scalar_select %p845, %s34, 1
        %s847 = smul.addr %s846, 8
        %s848 = scalar_lea.vmem %s4, %s847
        %p849 = pneg %p175
        %p850 = pneg %p172
        %p851 = scmp.lt.s32.totalorder %s34, 1
        %s852 = scalar_select %p851, %s34, 1
        %s853 = smul.addr %s852, 8
        %s854 = scalar_lea.vmem %s5, %s853
        %p855 = pneg %p201
        %p856 = pneg %p198
        %p857 = pneg %p222
        %p858 = pneg %p219
        %p859 = pneg %p243
        %p860 = pneg %p240
        %p861 = pneg %p264
        %p862 = pneg %p261
        %p863 = pneg %p285
        %p864 = pneg %p282
        %p865 = pneg %p306
        %p866 = pneg %p303
        %p867 = pneg %p327
        %p868 = pneg %p324
        %p869 = pneg %p348
        %p870 = pneg %p345
        %p871 = pneg %p374
        %p872 = pneg %p371
        %s873 = sand.u32 %s361, 1
        %s874 = scalar_lea.sflag [#allocation10], %s873
        %s875 = sand.u32 %s361, 1
        %s876 = smul.addr %s875, 8
        %s877 = scalar_lea.vmem [#allocation17], %s876
        %s878 = smul.u32 8, %s34
        %s879 = smul.u32 8, %s34
        %s880 = smul.u32 8, %s34
        %s881 = smul.u32 8, %s34
        %p882 = scmp.lt.s32.totalorder %s34, 1
        %s883 = scalar_select %p882, %s34, 1
        %s884 = smul.addr %s883, 8
        %s885 = scalar_lea.vmem %s4, %s884
        %p886 = scmp.lt.s32.totalorder %s34, 1
        %s887 = scalar_select %p886, %s34, 1
        %s888 = smul.addr %s887, 8
        %s889 = scalar_lea.vmem %s5, %s888
        %p890 = scmp.eq.s32.totalorder %s35, 0
        // Predicated region
        $region245: #{tpu_custom_call.1} parent=207 // pred_check
          %p891 = pneg %p890
        $region246: #{tpu_custom_call.1} parent=207 // pred_check_branch
          %893 = sbr.rel (%p891) target = $region248
        $region247: #{tpu_custom_call.1} parent=207 // pred_region
          %894 = vst [vmem:[#allocation2] sm:$0xff] 0.0
          %895 = vst [vmem:[#allocation3] sm:$0xff] 0.0
        $region248: #{tpu_custom_call.1} parent=207 // pred_fallthru
          _
        %v896 = vld [vmem:[#allocation2] sm:$0xff]
        %v897 = vld [vmem:[%s776] sm:$0xff]
        %v898 = vld [vmem:[%s776 + $0x8] sm:$0xff]
        %v899 = vld [vmem:[%s776 + $0x10] sm:$0xff]
        %v900 = vld [vmem:[%s776 + $0x18] sm:$0xff]
        %v901 = vld [vmem:[%s776 + $0x20] sm:$0xff]
        %v902 = vld [vmem:[%s776 + $0x28] sm:$0xff]
        %v903 = vld [vmem:[%s776 + $0x30] sm:$0xff]
        %v904 = vld [vmem:[%s776 + $0x38] sm:$0xff]
        %v905 = vld [vmem:[%s790] sm:$0xff]
        %v906 = vld [vmem:[%s790 + $0x8] sm:$0xff]
        %v907 = vld [vmem:[%s790 + $0x10] sm:$0xff]
        %v908 = vld [vmem:[%s790 + $0x18] sm:$0xff]
        %v909 = vld [vmem:[%s790 + $0x20] sm:$0xff]
        %v910 = vld [vmem:[%s790 + $0x28] sm:$0xff]
        %v911 = vld [vmem:[%s790 + $0x30] sm:$0xff]
        %v912 = vld [vmem:[%s790 + $0x38] sm:$0xff]
        %914 = vset.pattern.permute.xlu0 0
        %915 = vperm.xlu0 %914, %v905
        %v916 = vpop.permute.xlu0 %915
        %919 = vset.pattern.permute.xlu0 0
        %920 = vperm.xlu0 %919, %v906
        %v921 = vpop.permute.xlu0 %920
        %924 = vset.pattern.permute.xlu0 0
        %925 = vperm.xlu0 %924, %v907
        %v926 = vpop.permute.xlu0 %925
        %929 = vset.pattern.permute.xlu0 0
        %930 = vperm.xlu0 %929, %v908
        %v931 = vpop.permute.xlu0 %930
        %934 = vset.pattern.permute.xlu0 0
        %935 = vperm.xlu0 %934, %v909
        %v936 = vpop.permute.xlu0 %935
        %939 = vset.pattern.permute.xlu0 0
        %940 = vperm.xlu0 %939, %v910
        %v941 = vpop.permute.xlu0 %940
        %944 = vset.pattern.permute.xlu0 0
        %945 = vperm.xlu0 %944, %v911
        %v946 = vpop.permute.xlu0 %945
        %949 = vset.pattern.permute.xlu0 0
        %950 = vperm.xlu0 %949, %v912
        %v951 = vpop.permute.xlu0 %950
        %v953 = vmul.f32 %v897, %v916
        %v954 = vmul.f32 %v898, %v921
        %v955 = vmul.f32 %v899, %v926
        %v956 = vmul.f32 %v900, %v931
        %v957 = vmul.f32 %v901, %v936
        %v958 = vmul.f32 %v902, %v941
        %v959 = vmul.f32 %v903, %v946
        %v960 = vmul.f32 %v904, %v951
        %v961 = vrot.slane %v953, 4
        %v962 = vadd.f32 %v953, %v961
        %v963 = vrot.slane %v962, 2
        %v964 = vadd.f32 %v962, %v963
        %v965 = vrot.slane %v964, 1
        %v966 = vadd.f32 %v964, %v965
        %v967 = vrot.slane %v954, 4
        %v968 = vadd.f32 %v954, %v967
        %v969 = vrot.slane %v968, 2
        %v970 = vadd.f32 %v968, %v969
        %v971 = vrot.slane %v970, 1
        %v972 = vadd.f32 %v970, %v971
        %v973 = vrot.slane %v955, 4
        %v974 = vadd.f32 %v955, %v973
        %v975 = vrot.slane %v974, 2
        %v976 = vadd.f32 %v974, %v975
        %v977 = vrot.slane %v976, 1
        %v978 = vadd.f32 %v976, %v977
        %v979 = vrot.slane %v956, 4
        %v980 = vadd.f32 %v956, %v979
        %v981 = vrot.slane %v980, 2
        %v982 = vadd.f32 %v980, %v981
        %v983 = vrot.slane %v982, 1
        %v984 = vadd.f32 %v982, %v983
        %v985 = vrot.slane %v957, 4
        %v986 = vadd.f32 %v957, %v985
        %v987 = vrot.slane %v986, 2
        %v988 = vadd.f32 %v986, %v987
        %v989 = vrot.slane %v988, 1
        %v990 = vadd.f32 %v988, %v989
        %v991 = vrot.slane %v958, 4
        %v992 = vadd.f32 %v958, %v991
        %v993 = vrot.slane %v992, 2
        %v994 = vadd.f32 %v992, %v993
        %v995 = vrot.slane %v994, 1
        %v996 = vadd.f32 %v994, %v995
        %v997 = vrot.slane %v959, 4
        %v998 = vadd.f32 %v959, %v997
        %v999 = vrot.slane %v998, 2
        %v1000 = vadd.f32 %v998, %v999
        %v1001 = vrot.slane %v1000, 1
        %v1002 = vadd.f32 %v1000, %v1001
        %v1003 = vrot.slane %v960, 4
        %v1004 = vadd.f32 %v960, %v1003
        %v1005 = vrot.slane %v1004, 2
        %v1006 = vadd.f32 %v1004, %v1005
        %v1007 = vrot.slane %v1006, 1
        %v1008 = vadd.f32 %v1006, %v1007
        %vm1017 = vcmask 1041409
        %v1018 = vsel %vm1017, %v972, %v966
        %vm1019 = vcmask 1042434
        %v1020 = vsel %vm1019, %v978, %v1018
        %vm1021 = vcmask 1043459
        %v1022 = vsel %vm1021, %v984, %v1020
        %vm1023 = vcmask 1044484
        %v1024 = vsel %vm1023, %v990, %v1022
        %vm1025 = vcmask 1045509
        %v1026 = vsel %vm1025, %v996, %v1024
        %vm1027 = vcmask 1046534
        %v1028 = vsel %vm1027, %v1002, %v1026
        %vm1029 = vcmask 1047559
        %v1030 = vsel %vm1029, %v1008, %v1028
        %v1032 = vadd.f32 %v896, %v1030
        %1033 = vst [vmem:[#allocation2] sm:$0xff] %v1032
        %v1034 = vld [vmem:[#allocation3] sm:$0xff]
        %v1035 = vld [vmem:[%s783] sm:$0xff]
        %v1036 = vld [vmem:[%s783 + $0x8] sm:$0xff]
        %v1037 = vld [vmem:[%s783 + $0x10] sm:$0xff]
        %v1038 = vld [vmem:[%s783 + $0x18] sm:$0xff]
        %v1039 = vld [vmem:[%s783 + $0x20] sm:$0xff]
        %v1040 = vld [vmem:[%s783 + $0x28] sm:$0xff]
        %v1041 = vld [vmem:[%s783 + $0x30] sm:$0xff]
        %v1042 = vld [vmem:[%s783 + $0x38] sm:$0xff]
        %v1043 = vld [vmem:[%s797] sm:$0xff]
        %v1044 = vld [vmem:[%s797 + $0x8] sm:$0xff]
        %v1045 = vld [vmem:[%s797 + $0x10] sm:$0xff]
        %v1046 = vld [vmem:[%s797 + $0x18] sm:$0xff]
        %v1047 = vld [vmem:[%s797 + $0x20] sm:$0xff]
        %v1048 = vld [vmem:[%s797 + $0x28] sm:$0xff]
        %v1049 = vld [vmem:[%s797 + $0x30] sm:$0xff]
        %v1050 = vld [vmem:[%s797 + $0x38] sm:$0xff]
        %1052 = vset.pattern.permute.xlu0 0
        %1053 = vperm.xlu0 %1052, %v1043
        %v1054 = vpop.permute.xlu0 %1053
        %1057 = vset.pattern.permute.xlu0 0
        %1058 = vperm.xlu0 %1057, %v1044
        %v1059 = vpop.permute.xlu0 %1058
        %1062 = vset.pattern.permute.xlu0 0
        %1063 = vperm.xlu0 %1062, %v1045
        %v1064 = vpop.permute.xlu0 %1063
        %1067 = vset.pattern.permute.xlu0 0
        %1068 = vperm.xlu0 %1067, %v1046
        %v1069 = vpop.permute.xlu0 %1068
        %1072 = vset.pattern.permute.xlu0 0
        %1073 = vperm.xlu0 %1072, %v1047
        %v1074 = vpop.permute.xlu0 %1073
        %1077 = vset.pattern.permute.xlu0 0
        %1078 = vperm.xlu0 %1077, %v1048
        %v1079 = vpop.permute.xlu0 %1078
        %1082 = vset.pattern.permute.xlu0 0
        %1083 = vperm.xlu0 %1082, %v1049
        %v1084 = vpop.permute.xlu0 %1083
        %1087 = vset.pattern.permute.xlu0 0
        %1088 = vperm.xlu0 %1087, %v1050
        %v1089 = vpop.permute.xlu0 %1088
        %v1091 = vmul.f32 %v1035, %v1054
        %v1092 = vmul.f32 %v1036, %v1059
        %v1093 = vmul.f32 %v1037, %v1064
        %v1094 = vmul.f32 %v1038, %v1069
        %v1095 = vmul.f32 %v1039, %v1074
        %v1096 = vmul.f32 %v1040, %v1079
        %v1097 = vmul.f32 %v1041, %v1084
        %v1098 = vmul.f32 %v1042, %v1089
        %v1099 = vrot.slane %v1091, 4
        %v1100 = vadd.f32 %v1091, %v1099
        %v1101 = vrot.slane %v1100, 2
        %v1102 = vadd.f32 %v1100, %v1101
        %v1103 = vrot.slane %v1102, 1
        %v1104 = vadd.f32 %v1102, %v1103
        %v1105 = vrot.slane %v1092, 4
        %v1106 = vadd.f32 %v1092, %v1105
        %v1107 = vrot.slane %v1106, 2
        %v1108 = vadd.f32 %v1106, %v1107
        %v1109 = vrot.slane %v1108, 1
        %v1110 = vadd.f32 %v1108, %v1109
        %v1111 = vrot.slane %v1093, 4
        %v1112 = vadd.f32 %v1093, %v1111
        %v1113 = vrot.slane %v1112, 2
        %v1114 = vadd.f32 %v1112, %v1113
        %v1115 = vrot.slane %v1114, 1
        %v1116 = vadd.f32 %v1114, %v1115
        %v1117 = vrot.slane %v1094, 4
        %v1118 = vadd.f32 %v1094, %v1117
        %v1119 = vrot.slane %v1118, 2
        %v1120 = vadd.f32 %v1118, %v1119
        %v1121 = vrot.slane %v1120, 1
        %v1122 = vadd.f32 %v1120, %v1121
        %v1123 = vrot.slane %v1095, 4
        %v1124 = vadd.f32 %v1095, %v1123
        %v1125 = vrot.slane %v1124, 2
        %v1126 = vadd.f32 %v1124, %v1125
        %v1127 = vrot.slane %v1126, 1
        %v1128 = vadd.f32 %v1126, %v1127
        %v1129 = vrot.slane %v1096, 4
        %v1130 = vadd.f32 %v1096, %v1129
        %v1131 = vrot.slane %v1130, 2
        %v1132 = vadd.f32 %v1130, %v1131
        %v1133 = vrot.slane %v1132, 1
        %v1134 = vadd.f32 %v1132, %v1133
        %v1135 = vrot.slane %v1097, 4
        %v1136 = vadd.f32 %v1097, %v1135
        %v1137 = vrot.slane %v1136, 2
        %v1138 = vadd.f32 %v1136, %v1137
        %v1139 = vrot.slane %v1138, 1
        %v1140 = vadd.f32 %v1138, %v1139
        %v1141 = vrot.slane %v1098, 4
        %v1142 = vadd.f32 %v1098, %v1141
        %v1143 = vrot.slane %v1142, 2
        %v1144 = vadd.f32 %v1142, %v1143
        %v1145 = vrot.slane %v1144, 1
        %v1146 = vadd.f32 %v1144, %v1145
        %v1155 = vsel %vm1017, %v1110, %v1104
        %v1156 = vsel %vm1019, %v1116, %v1155
        %v1157 = vsel %vm1021, %v1122, %v1156
        %v1158 = vsel %vm1023, %v1128, %v1157
        %v1159 = vsel %vm1025, %v1134, %v1158
        %v1160 = vsel %vm1027, %v1140, %v1159
        %v1161 = vsel %vm1029, %v1146, %v1160
        %v1163 = vadd.f32 %v1034, %v1161
        %1164 = vst [vmem:[#allocation3] sm:$0xff] %v1163
        %p1165 = scmp.eq.s32.totalorder %s35, 1
        // Predicated region
        $region249: #{tpu_custom_call.1} parent=207 // pred_check
          %p1166 = pneg %p1165
        $region250: #{tpu_custom_call.1} parent=207 // pred_check_branch
          %1168 = sbr.rel (%p1166) target = $region252
        $region251: #{tpu_custom_call.1} parent=207 // pred_region
          %v1169 = vld [vmem:[#allocation2] sm:$0xff]
          %v1170 = vld [vmem:[%s885] sm:$0xff]
          %1172 = vset.pattern.permute.xlu0 0
          %1173 = vperm.xlu0 %1172, %v1170
          %v1174 = vpop.permute.xlu0 %1173
          %v1176 = vmul.f32 %v1169, %v1174
          %v1177 = vld [vmem:[#allocation3] sm:$0xff]
          %v1178 = vld [vmem:[%s889] sm:$0xff]
          %1180 = vset.pattern.permute.xlu0 0
          %1181 = vperm.xlu0 %1180, %v1178
          %v1182 = vpop.permute.xlu0 %1181
          %v1184 = vmul.f32 %v1177, %v1182
          %v1185 = vsub.f32 %v1176, %v1184
          %v1186 = vand.u32 2147483647, %v1185
          %v1187 = vmul.f32 %v1176, %v1184
          %v1188 = vld [vmem:[#allocation8] sm:$0xff]
          %v1189 = vld [vmem:[#allocation8 + $0x8] sm:$0xff]
          %v1190 = vld [vmem:[#allocation8 + $0x10] sm:$0xff]
          %v1191 = vld [vmem:[#allocation8 + $0x18] sm:$0xff]
          %v1192 = vld [vmem:[#allocation8 + $0x20] sm:$0xff]
          %v1193 = vld [vmem:[#allocation8 + $0x28] sm:$0xff]
          %v1194 = vld [vmem:[#allocation8 + $0x30] sm:$0xff]
          %v1195 = vld [vmem:[#allocation8 + $0x38] sm:$0xff]
          %v1196 = vld [vmem:[#allocation8 + $0x40] sm:$0xff]
          %v1197 = vld [vmem:[#allocation8 + $0x48] sm:$0xff]
          %v1198 = vld [vmem:[#allocation8 + $0x50] sm:$0xff]
          %v1199 = vld [vmem:[#allocation8 + $0x58] sm:$0xff]
          %v1200 = vld [vmem:[#allocation8 + $0x60] sm:$0xff]
          %v1201 = vld [vmem:[#allocation8 + $0x68] sm:$0xff]
          %v1202 = vld [vmem:[#allocation8 + $0x70] sm:$0xff]
          %v1203 = vld [vmem:[#allocation8 + $0x78] sm:$0xff]
          %v1204 = vld [vmem:[#allocation11] sm:$0xff]
          %v1205 = vld [vmem:[#allocation11 + $0x8] sm:$0xff]
          %v1206 = vld [vmem:[#allocation11 + $0x10] sm:$0xff]
          %v1207 = vld [vmem:[#allocation11 + $0x18] sm:$0xff]
          %v1208 = vld [vmem:[#allocation11 + $0x20] sm:$0xff]
          %v1209 = vld [vmem:[#allocation11 + $0x28] sm:$0xff]
          %v1210 = vld [vmem:[#allocation11 + $0x30] sm:$0xff]
          %v1211 = vld [vmem:[#allocation11 + $0x38] sm:$0xff]
          %v1212 = vld [vmem:[#allocation11 + $0x40] sm:$0xff]
          %v1213 = vld [vmem:[#allocation11 + $0x48] sm:$0xff]
          %v1214 = vld [vmem:[#allocation11 + $0x50] sm:$0xff]
          %v1215 = vld [vmem:[#allocation11 + $0x58] sm:$0xff]
          %v1216 = vld [vmem:[#allocation11 + $0x60] sm:$0xff]
          %v1217 = vld [vmem:[#allocation11 + $0x68] sm:$0xff]
          %v1218 = vld [vmem:[#allocation11 + $0x70] sm:$0xff]
          %v1219 = vld [vmem:[#allocation11 + $0x78] sm:$0xff]
          %1220 = vmatprep.subr.mxu0 0.0
          %1221 = vmatpush1.msra.mxu0 %v1204
          %1222 = vmatprep.subr.mxu0 0.0
          %1223 = vmatpush1.msra.mxu0 %v1205
          %1224 = vmatprep.subr.mxu0 0.0
          %1225 = vmatpush1.msra.mxu0 %v1206
          %1226 = vmatprep.subr.mxu0 0.0
          %1227 = vmatpush1.msra.mxu0 %v1207
          %1228 = vmatprep.subr.mxu0 0.0
          %1229 = vmatpush1.msra.mxu0 %v1208
          %1230 = vmatprep.subr.mxu0 0.0
          %1231 = vmatpush1.msra.mxu0 %v1209
          %1232 = vmatprep.subr.mxu0 0.0
          %1233 = vmatpush1.msra.mxu0 %v1210
          %1234 = vmatprep.subr.mxu0 0.0
          %1235 = vmatpush1.msra.mxu0 %v1211
          %1236 = vmatprep.subr.mxu0 0.0
          %1237 = vmatpush1.msra.mxu0 %v1212
          %1238 = vmatprep.subr.mxu0 0.0
          %1239 = vmatpush1.msra.mxu0 %v1213
          %1240 = vmatprep.subr.mxu0 0.0
          %1241 = vmatpush1.msra.mxu0 %v1214
          %1242 = vmatprep.subr.mxu0 0.0
          %1243 = vmatpush1.msra.mxu0 %v1215
          %1244 = vmatprep.subr.mxu0 0.0
          %1245 = vmatpush1.msra.mxu0 %v1216
          %1246 = vmatprep.subr.mxu0 0.0
          %1247 = vmatpush1.msra.mxu0 %v1217
          %1248 = vmatprep.subr.mxu0 0.0
          %1249 = vmatpush1.msra.mxu0 %v1218
          %1250 = vmatprep.subr.mxu0 0.0
          %1251 = vmatpush1.msra.mxu0 %v1219
          %1252 = vmatprep.subr.mxu0 0.0
          %1253 = vmatpush1.msra.mxu0 0.0
          %1254 = vmatprep.subr.mxu0 0.0
          %1255 = vmatpush1.msra.mxu0 0.0
          %1256 = vmatprep.subr.mxu0 0.0
          %1257 = vmatpush1.msra.mxu0 0.0
          %1258 = vmatprep.subr.mxu0 0.0
          %1259 = vmatpush1.msra.mxu0 0.0
          %1260 = vmatprep.subr.mxu0 0.0
          %1261 = vmatpush1.msra.mxu0 0.0
          %1262 = vmatprep.subr.mxu0 0.0
          %1263 = vmatpush1.msra.mxu0 0.0
          %1264 = vmatprep.subr.mxu0 0.0
          %1265 = vmatpush1.msra.mxu0 0.0
          %1266 = vmatprep.subr.mxu0 0.0
          %1267 = vmatpush1.msra.mxu0 0.0
          %1268 = vmatprep.subr.mxu0 0.0
          %1269 = vmatpush1.msra.mxu0 0.0
          %1270 = vmatprep.subr.mxu0 0.0
          %1271 = vmatpush1.msra.mxu0 0.0
          %1272 = vmatprep.subr.mxu0 0.0
          %1273 = vmatpush1.msra.mxu0 0.0
          %1274 = vmatprep.subr.mxu0 0.0
          %1275 = vmatpush1.msra.mxu0 0.0
          %1276 = vmatprep.subr.mxu0 0.0
          %1277 = vmatpush1.msra.mxu0 0.0
          %1278 = vmatprep.subr.mxu0 0.0
          %1279 = vmatpush1.msra.mxu0 0.0
          %1280 = vmatprep.subr.mxu0 0.0
          %1281 = vmatpush1.msra.mxu0 0.0
          %1282 = vmatprep.subr.mxu0 0.0
          %1283 = vmatpush1.msra.mxu0 0.0
          %1284 = vmatprep.mubr.f32.mxu0 0.0
          %1285 = vmatmul.mubr.f32.gmra.mrb[0].mxu0 %v1184
          %v1286 = vpop.f32.mrb[0].mxu0
          %v1287 = vadd.f32 0.0, %v1286
          %v1288 = vpop.f32.mrb[0].mxu0
          %1289 = vdwg.mxu0
          %1290 = vmatprep.subr.mxu0 0.0
          %1291 = vmatpush1.msra.mxu0 %v1188
          %1292 = vmatprep.subr.mxu0 0.0
          %1293 = vmatpush1.msra.mxu0 %v1189
          %1294 = vmatprep.subr.mxu0 0.0
          %1295 = vmatpush1.msra.mxu0 %v1190
          %1296 = vmatprep.subr.mxu0 0.0
          %1297 = vmatpush1.msra.mxu0 %v1191
          %1298 = vmatprep.subr.mxu0 0.0
          %1299 = vmatpush1.msra.mxu0 %v1192
          %1300 = vmatprep.subr.mxu0 0.0
          %1301 = vmatpush1.msra.mxu0 %v1193
          %1302 = vmatprep.subr.mxu0 0.0
          %1303 = vmatpush1.msra.mxu0 %v1194
          %1304 = vmatprep.subr.mxu0 0.0
          %1305 = vmatpush1.msra.mxu0 %v1195
          %1306 = vmatprep.subr.mxu0 0.0
          %1307 = vmatpush1.msra.mxu0 %v1196
          %1308 = vmatprep.subr.mxu0 0.0
          %1309 = vmatpush1.msra.mxu0 %v1197
          %1310 = vmatprep.subr.mxu0 0.0
          %1311 = vmatpush1.msra.mxu0 %v1198
          %1312 = vmatprep.subr.mxu0 0.0
          %1313 = vmatpush1.msra.mxu0 %v1199
          %1314 = vmatprep.subr.mxu0 0.0
          %1315 = vmatpush1.msra.mxu0 %v1200
          %1316 = vmatprep.subr.mxu0 0.0
          %1317 = vmatpush1.msra.mxu0 %v1201
          %1318 = vmatprep.subr.mxu0 0.0
          %1319 = vmatpush1.msra.mxu0 %v1202
          %1320 = vmatprep.subr.mxu0 0.0
          %1321 = vmatpush1.msra.mxu0 %v1203
          %1322 = vmatprep.subr.mxu0 0.0
          %1323 = vmatpush1.msra.mxu0 0.0
          %1324 = vmatprep.subr.mxu0 0.0
          %1325 = vmatpush1.msra.mxu0 0.0
          %1326 = vmatprep.subr.mxu0 0.0
          %1327 = vmatpush1.msra.mxu0 0.0
          %1328 = vmatprep.subr.mxu0 0.0
          %1329 = vmatpush1.msra.mxu0 0.0
          %1330 = vmatprep.subr.mxu0 0.0
          %1331 = vmatpush1.msra.mxu0 0.0
          %1332 = vmatprep.subr.mxu0 0.0
          %1333 = vmatpush1.msra.mxu0 0.0
          %1334 = vmatprep.subr.mxu0 0.0
          %1335 = vmatpush1.msra.mxu0 0.0
          %1336 = vmatprep.subr.mxu0 0.0
          %1337 = vmatpush1.msra.mxu0 0.0
          %1338 = vmatprep.subr.mxu0 0.0
          %1339 = vmatpush1.msra.mxu0 0.0
          %1340 = vmatprep.subr.mxu0 0.0
          %1341 = vmatpush1.msra.mxu0 0.0
          %1342 = vmatprep.subr.mxu0 0.0
          %1343 = vmatpush1.msra.mxu0 0.0
          %1344 = vmatprep.subr.mxu0 0.0
          %1345 = vmatpush1.msra.mxu0 0.0
          %1346 = vmatprep.subr.mxu0 0.0
          %1347 = vmatpush1.msra.mxu0 0.0
          %1348 = vmatprep.subr.mxu0 0.0
          %1349 = vmatpush1.msra.mxu0 0.0
          %1350 = vmatprep.subr.mxu0 0.0
          %1351 = vmatpush1.msra.mxu0 0.0
          %1352 = vmatprep.subr.mxu0 0.0
          %1353 = vmatpush1.msra.mxu0 0.0
          %1354 = vmatprep.mubr.f32.mxu0 0.0
          %1355 = vmatmul.mubr.f32.gmra.mrb[0].mxu0 %v1176
          %v1356 = vpop.f32.mrb[0].mxu0
          %v1357 = vadd.f32 %v1287, %v1356
          %v1358 = vpop.f32.mrb[0].mxu0
          %1359 = vdwg.mxu0
          %v1360 = vld [vmem:[#allocation13] sm:$0xff]
          %v1361 = vld [vmem:[#allocation13 + $0x8] sm:$0xff]
          %v1362 = vld [vmem:[#allocation13 + $0x10] sm:$0xff]
          %v1363 = vld [vmem:[#allocation13 + $0x18] sm:$0xff]
          %v1364 = vld [vmem:[#allocation13 + $0x20] sm:$0xff]
          %v1365 = vld [vmem:[#allocation13 + $0x28] sm:$0xff]
          %v1366 = vld [vmem:[#allocation13 + $0x30] sm:$0xff]
          %v1367 = vld [vmem:[#allocation13 + $0x38] sm:$0xff]
          %v1368 = vld [vmem:[#allocation13 + $0x40] sm:$0xff]
          %v1369 = vld [vmem:[#allocation13 + $0x48] sm:$0xff]
          %v1370 = vld [vmem:[#allocation13 + $0x50] sm:$0xff]
          %v1371 = vld [vmem:[#allocation13 + $0x58] sm:$0xff]
          %v1372 = vld [vmem:[#allocation13 + $0x60] sm:$0xff]
          %v1373 = vld [vmem:[#allocation13 + $0x68] sm:$0xff]
          %v1374 = vld [vmem:[#allocation13 + $0x70] sm:$0xff]
          %v1375 = vld [vmem:[#allocation13 + $0x78] sm:$0xff]
          %1376 = vmatprep.subr.mxu0 0.0
          %1377 = vmatpush1.msra.mxu0 %v1360
          %1378 = vmatprep.subr.mxu0 0.0
          %1379 = vmatpush1.msra.mxu0 %v1361
          %1380 = vmatprep.subr.mxu0 0.0
          %1381 = vmatpush1.msra.mxu0 %v1362
          %1382 = vmatprep.subr.mxu0 0.0
          %1383 = vmatpush1.msra.mxu0 %v1363
          %1384 = vmatprep.subr.mxu0 0.0
          %1385 = vmatpush1.msra.mxu0 %v1364
          %1386 = vmatprep.subr.mxu0 0.0
          %1387 = vmatpush1.msra.mxu0 %v1365
          %1388 = vmatprep.subr.mxu0 0.0
          %1389 = vmatpush1.msra.mxu0 %v1366
          %1390 = vmatprep.subr.mxu0 0.0
          %1391 = vmatpush1.msra.mxu0 %v1367
          %1392 = vmatprep.subr.mxu0 0.0
          %1393 = vmatpush1.msra.mxu0 %v1368
          %1394 = vmatprep.subr.mxu0 0.0
          %1395 = vmatpush1.msra.mxu0 %v1369
          %1396 = vmatprep.subr.mxu0 0.0
          %1397 = vmatpush1.msra.mxu0 %v1370
          %1398 = vmatprep.subr.mxu0 0.0
          %1399 = vmatpush1.msra.mxu0 %v1371
          %1400 = vmatprep.subr.mxu0 0.0
          %1401 = vmatpush1.msra.mxu0 %v1372
          %1402 = vmatprep.subr.mxu0 0.0
          %1403 = vmatpush1.msra.mxu0 %v1373
          %1404 = vmatprep.subr.mxu0 0.0
          %1405 = vmatpush1.msra.mxu0 %v1374
          %1406 = vmatprep.subr.mxu0 0.0
          %1407 = vmatpush1.msra.mxu0 %v1375
          %1408 = vmatprep.subr.mxu0 0.0
          %1409 = vmatpush1.msra.mxu0 0.0
          %1410 = vmatprep.subr.mxu0 0.0
          %1411 = vmatpush1.msra.mxu0 0.0
          %1412 = vmatprep.subr.mxu0 0.0
          %1413 = vmatpush1.msra.mxu0 0.0
          %1414 = vmatprep.subr.mxu0 0.0
          %1415 = vmatpush1.msra.mxu0 0.0
          %1416 = vmatprep.subr.mxu0 0.0
          %1417 = vmatpush1.msra.mxu0 0.0
          %1418 = vmatprep.subr.mxu0 0.0
          %1419 = vmatpush1.msra.mxu0 0.0
          %1420 = vmatprep.subr.mxu0 0.0
          %1421 = vmatpush1.msra.mxu0 0.0
          %1422 = vmatprep.subr.mxu0 0.0
          %1423 = vmatpush1.msra.mxu0 0.0
          %1424 = vmatprep.subr.mxu0 0.0
          %1425 = vmatpush1.msra.mxu0 0.0
          %1426 = vmatprep.subr.mxu0 0.0
          %1427 = vmatpush1.msra.mxu0 0.0
          %1428 = vmatprep.subr.mxu0 0.0
          %1429 = vmatpush1.msra.mxu0 0.0
          %1430 = vmatprep.subr.mxu0 0.0
          %1431 = vmatpush1.msra.mxu0 0.0
          %1432 = vmatprep.subr.mxu0 0.0
          %1433 = vmatpush1.msra.mxu0 0.0
          %1434 = vmatprep.subr.mxu0 0.0
          %1435 = vmatpush1.msra.mxu0 0.0
          %1436 = vmatprep.subr.mxu0 0.0
          %1437 = vmatpush1.msra.mxu0 0.0
          %1438 = vmatprep.subr.mxu0 0.0
          %1439 = vmatpush1.msra.mxu0 0.0
          %1440 = vmatprep.mubr.f32.mxu0 0.0
          %1441 = vmatmul.mubr.f32.gmra.mrb[0].mxu0 %v1186
          %v1442 = vpop.f32.mrb[0].mxu0
          %v1443 = vadd.f32 0.0, %v1442
          %v1444 = vpop.f32.mrb[0].mxu0
          %1445 = vdwg.mxu0
          %v1446 = vadd.f32 %v1357, %v1443
          %v1447 = vld [vmem:[#allocation14] sm:$0xff]
          %v1448 = vld [vmem:[#allocation14 + $0x8] sm:$0xff]
          %v1449 = vld [vmem:[#allocation14 + $0x10] sm:$0xff]
          %v1450 = vld [vmem:[#allocation14 + $0x18] sm:$0xff]
          %v1451 = vld [vmem:[#allocation14 + $0x20] sm:$0xff]
          %v1452 = vld [vmem:[#allocation14 + $0x28] sm:$0xff]
          %v1453 = vld [vmem:[#allocation14 + $0x30] sm:$0xff]
          %v1454 = vld [vmem:[#allocation14 + $0x38] sm:$0xff]
          %v1455 = vld [vmem:[#allocation14 + $0x40] sm:$0xff]
          %v1456 = vld [vmem:[#allocation14 + $0x48] sm:$0xff]
          %v1457 = vld [vmem:[#allocation14 + $0x50] sm:$0xff]
          %v1458 = vld [vmem:[#allocation14 + $0x58] sm:$0xff]
          %v1459 = vld [vmem:[#allocation14 + $0x60] sm:$0xff]
          %v1460 = vld [vmem:[#allocation14 + $0x68] sm:$0xff]
          %v1461 = vld [vmem:[#allocation14 + $0x70] sm:$0xff]
          %v1462 = vld [vmem:[#allocation14 + $0x78] sm:$0xff]
          %1463 = vmatprep.subr.mxu0 0.0
          %1464 = vmatpush1.msra.mxu0 %v1447
          %1465 = vmatprep.subr.mxu0 0.0
          %1466 = vmatpush1.msra.mxu0 %v1448
          %1467 = vmatprep.subr.mxu0 0.0
          %1468 = vmatpush1.msra.mxu0 %v1449
          %1469 = vmatprep.subr.mxu0 0.0
          %1470 = vmatpush1.msra.mxu0 %v1450
          %1471 = vmatprep.subr.mxu0 0.0
          %1472 = vmatpush1.msra.mxu0 %v1451
          %1473 = vmatprep.subr.mxu0 0.0
          %1474 = vmatpush1.msra.mxu0 %v1452
          %1475 = vmatprep.subr.mxu0 0.0
          %1476 = vmatpush1.msra.mxu0 %v1453
          %1477 = vmatprep.subr.mxu0 0.0
          %1478 = vmatpush1.msra.mxu0 %v1454
          %1479 = vmatprep.subr.mxu0 0.0
          %1480 = vmatpush1.msra.mxu0 %v1455
          %1481 = vmatprep.subr.mxu0 0.0
          %1482 = vmatpush1.msra.mxu0 %v1456
          %1483 = vmatprep.subr.mxu0 0.0
          %1484 = vmatpush1.msra.mxu0 %v1457
          %1485 = vmatprep.subr.mxu0 0.0
          %1486 = vmatpush1.msra.mxu0 %v1458
          %1487 = vmatprep.subr.mxu0 0.0
          %1488 = vmatpush1.msra.mxu0 %v1459
          %1489 = vmatprep.subr.mxu0 0.0
          %1490 = vmatpush1.msra.mxu0 %v1460
          %1491 = vmatprep.subr.mxu0 0.0
          %1492 = vmatpush1.msra.mxu0 %v1461
          %1493 = vmatprep.subr.mxu0 0.0
          %1494 = vmatpush1.msra.mxu0 %v1462
          %1495 = vmatprep.subr.mxu0 0.0
          %1496 = vmatpush1.msra.mxu0 0.0
          %1497 = vmatprep.subr.mxu0 0.0
          %1498 = vmatpush1.msra.mxu0 0.0
          %1499 = vmatprep.subr.mxu0 0.0
          %1500 = vmatpush1.msra.mxu0 0.0
          %1501 = vmatprep.subr.mxu0 0.0
          %1502 = vmatpush1.msra.mxu0 0.0
          %1503 = vmatprep.subr.mxu0 0.0
          %1504 = vmatpush1.msra.mxu0 0.0
          %1505 = vmatprep.subr.mxu0 0.0
          %1506 = vmatpush1.msra.mxu0 0.0
          %1507 = vmatprep.subr.mxu0 0.0
          %1508 = vmatpush1.msra.mxu0 0.0
          %1509 = vmatprep.subr.mxu0 0.0
          %1510 = vmatpush1.msra.mxu0 0.0
          %1511 = vmatprep.subr.mxu0 0.0
          %1512 = vmatpush1.msra.mxu0 0.0
          %1513 = vmatprep.subr.mxu0 0.0
          %1514 = vmatpush1.msra.mxu0 0.0
          %1515 = vmatprep.subr.mxu0 0.0
          %1516 = vmatpush1.msra.mxu0 0.0
          %1517 = vmatprep.subr.mxu0 0.0
          %1518 = vmatpush1.msra.mxu0 0.0
          %1519 = vmatprep.subr.mxu0 0.0
          %1520 = vmatpush1.msra.mxu0 0.0
          %1521 = vmatprep.subr.mxu0 0.0
          %1522 = vmatpush1.msra.mxu0 0.0
          %1523 = vmatprep.subr.mxu0 0.0
          %1524 = vmatpush1.msra.mxu0 0.0
          %1525 = vmatprep.subr.mxu0 0.0
          %1526 = vmatpush1.msra.mxu0 0.0
          %1527 = vmatprep.mubr.f32.mxu0 0.0
          %1528 = vmatmul.mubr.f32.gmra.mrb[0].mxu0 %v1187
          %v1529 = vpop.f32.mrb[0].mxu0
          %v1530 = vadd.f32 0.0, %v1529
          %v1531 = vpop.f32.mrb[0].mxu0
          %1532 = vdwg.mxu0
          %v1533 = vadd.f32 %v1446, %v1530
          %v1534 = vld [vmem:[%s10] sm:$0x1]
          %v1536 = vlaneseq
          %v1537 = vshrl.u32 %v1536, 7
          %v1538 = vsub.s32 0, %v1537
          %v1539 = vrot.slane %v1534, %v1538
          %v1541 = vadd.f32 %v1533, %v1539
          %v1542 = vtanh.pop %v1541
          %v1543 = vld [vmem:[#allocation16] sm:$0xff]
          %v1544 = vld [vmem:[#allocation16 + $0x8] sm:$0xff]
          %v1545 = vld [vmem:[#allocation16 + $0x10] sm:$0xff]
          %v1546 = vld [vmem:[#allocation16 + $0x18] sm:$0xff]
          %v1547 = vld [vmem:[#allocation16 + $0x20] sm:$0xff]
          %v1548 = vld [vmem:[#allocation16 + $0x28] sm:$0xff]
          %v1549 = vld [vmem:[#allocation16 + $0x30] sm:$0xff]
          %v1550 = vld [vmem:[#allocation16 + $0x38] sm:$0xff]
          %v1551 = vld [vmem:[#allocation16 + $0x40] sm:$0xff]
          %v1552 = vld [vmem:[#allocation16 + $0x48] sm:$0xff]
          %v1553 = vld [vmem:[#allocation16 + $0x50] sm:$0xff]
          %v1554 = vld [vmem:[#allocation16 + $0x58] sm:$0xff]
          %v1555 = vld [vmem:[#allocation16 + $0x60] sm:$0xff]
          %v1556 = vld [vmem:[#allocation16 + $0x68] sm:$0xff]
          %v1557 = vld [vmem:[#allocation16 + $0x70] sm:$0xff]
          %v1558 = vld [vmem:[#allocation16 + $0x78] sm:$0xff]
          %v1559 = vld [vmem:[%s12] sm:$0x1]
          %v1561 = vlaneseq
          %v1562 = vshrl.u32 %v1561, 7
          %v1563 = vsub.s32 0, %v1562
          %v1564 = vrot.slane %v1559, %v1563
          %1566 = vmatprep.subr.mxu0 0.0
          %1567 = vmatpush1.msra.mxu0 %v1543
          %1568 = vmatprep.subr.mxu0 0.0
          %1569 = vmatpush1.msra.mxu0 %v1544
          %1570 = vmatprep.subr.mxu0 0.0
          %1571 = vmatpush1.msra.mxu0 %v1545
          %1572 = vmatprep.subr.mxu0 0.0
          %1573 = vmatpush1.msra.mxu0 %v1546
          %1574 = vmatprep.subr.mxu0 0.0
          %1575 = vmatpush1.msra.mxu0 %v1547
          %1576 = vmatprep.subr.mxu0 0.0
          %1577 = vmatpush1.msra.mxu0 %v1548
          %1578 = vmatprep.subr.mxu0 0.0
          %1579 = vmatpush1.msra.mxu0 %v1549
          %1580 = vmatprep.subr.mxu0 0.0
          %1581 = vmatpush1.msra.mxu0 %v1550
          %1582 = vmatprep.subr.mxu0 0.0
          %1583 = vmatpush1.msra.mxu0 %v1551
          %1584 = vmatprep.subr.mxu0 0.0
          %1585 = vmatpush1.msra.mxu0 %v1552
          %1586 = vmatprep.subr.mxu0 0.0
          %1587 = vmatpush1.msra.mxu0 %v1553
          %1588 = vmatprep.subr.mxu0 0.0
          %1589 = vmatpush1.msra.mxu0 %v1554
          %1590 = vmatprep.subr.mxu0 0.0
          %1591 = vmatpush1.msra.mxu0 %v1555
          %1592 = vmatprep.subr.mxu0 0.0
          %1593 = vmatpush1.msra.mxu0 %v1556
          %1594 = vmatprep.subr.mxu0 0.0
          %1595 = vmatpush1.msra.mxu0 %v1557
          %1596 = vmatprep.subr.mxu0 0.0
          %1597 = vmatpush1.msra.mxu0 %v1558
          %1598 = vmatprep.subr.mxu0 0.0
          %1599 = vmatpush1.msra.mxu0 0.0
          %1600 = vmatprep.subr.mxu0 0.0
          %1601 = vmatpush1.msra.mxu0 0.0
          %1602 = vmatprep.subr.mxu0 0.0
          %1603 = vmatpush1.msra.mxu0 0.0
          %1604 = vmatprep.subr.mxu0 0.0
          %1605 = vmatpush1.msra.mxu0 0.0
          %1606 = vmatprep.subr.mxu0 0.0
          %1607 = vmatpush1.msra.mxu0 0.0
          %1608 = vmatprep.subr.mxu0 0.0
          %1609 = vmatpush1.msra.mxu0 0.0
          %1610 = vmatprep.subr.mxu0 0.0
          %1611 = vmatpush1.msra.mxu0 0.0
          %1612 = vmatprep.subr.mxu0 0.0
          %1613 = vmatpush1.msra.mxu0 0.0
          %1614 = vmatprep.subr.mxu0 0.0
          %1615 = vmatpush1.msra.mxu0 0.0
          %1616 = vmatprep.subr.mxu0 0.0
          %1617 = vmatpush1.msra.mxu0 0.0
          %1618 = vmatprep.subr.mxu0 0.0
          %1619 = vmatpush1.msra.mxu0 0.0
          %1620 = vmatprep.subr.mxu0 0.0
          %1621 = vmatpush1.msra.mxu0 0.0
          %1622 = vmatprep.subr.mxu0 0.0
          %1623 = vmatpush1.msra.mxu0 0.0
          %1624 = vmatprep.subr.mxu0 0.0
          %1625 = vmatpush1.msra.mxu0 0.0
          %1626 = vmatprep.subr.mxu0 0.0
          %1627 = vmatpush1.msra.mxu0 0.0
          %1628 = vmatprep.subr.mxu0 0.0
          %1629 = vmatpush1.msra.mxu0 0.0
          %1630 = vmatprep.mubr.f32.mxu0 0.0
          %1631 = vmatmul.mubr.f32.gmra.mrb[0].mxu0 %v1542
          %v1632 = vpop.f32.mrb[0].mxu0
          %v1633 = vadd.f32 %v1564, %v1632
          %v1634 = vpop.f32.mrb[0].mxu0
          %1635 = vdwg.mxu0
          %1636 = vst [vmem:[%s877] sm:$0xff] %v1633
        $region252: #{tpu_custom_call.1} parent=207 // pred_fallthru
          _
        %s1637 = sand.u32 %s361, 1
        %s1638 = scalar_lea.sflag [#allocation10], %s1637
        %s1639 = sand.u32 %s361, 1
        %s1640 = smul.addr %s1639, 8
        %s1641 = scalar_lea.vmem [#allocation17], %s1640
        // Predicated region
        $region253: #{tpu_custom_call.1} parent=207 // pred_check
          %p1642 = pneg %p371
        $region254: #{tpu_custom_call.1} parent=207 // pred_check_branch
          %1644 = sbr.rel (%p1642) target = $region256
        $region255: #{tpu_custom_call.1} parent=207 // pred_region
          %s1646 = ssub.s32 128, 128
          %1647 = vsyncadd %s1638, %s1646
          %s1648 = smul.addr %s34, 128
          %s1649 = scalar_lea.hbm %s13, %s1648
          %s1651 = sshll.u32 %s1641, 4
          %s1652 = int_to_ptr.vmem [resolvable:$true] %s1651
          %1654 = dma.vmem_to_hbm [thread:$0]  %s1652, 128, %s1649, %s1638
        $region256: #{tpu_custom_call.1} parent=207 // pred_fallthru
          _
      $region208: #{tpu_custom_call.1} parent=5 // pred_fallthru
        _
      %p1655 = scmp.le.s32.totalorder 2, %s25
      // Predicated region
      $region257: #{tpu_custom_call.1} parent=5 // pred_check
        %p1656 = pneg %p1655
      $region258: #{tpu_custom_call.1} parent=5 // pred_check_branch
        %1658 = sbr.rel (%p1656) target = $region260
      $region259: #{tpu_custom_call.1} parent=5 // pred_region
        %s1659 = ssub.s32 %s25, 2
        // Predicated region
        $region261: #{tpu_custom_call.1} parent=259 // pred_check
          %p1660 = pneg %p377
        $region262: #{tpu_custom_call.1} parent=259 // pred_check_branch
          %1662 = sbr.rel (%p1660) target = $region264
        $region263: #{tpu_custom_call.1} parent=259 // pred_region
          %s1663 = sand.u32 %s362, 1
          %s1664 = scalar_lea.sflag [#allocation10], %s1663
          %s1665 = sand.u32 %s362, 1
          %s1666 = smul.addr %s1665, 8
          %s1667 = scalar_lea.vmem [#allocation17], %s1666
          %1668 = dma.done %s1664, 128
        $region264: #{tpu_custom_call.1} parent=259 // pred_fallthru
          _
      $region260: #{tpu_custom_call.1} parent=5 // pred_fallthru
        _
    $region6: #{tpu_custom_call.1} parent=1 // loop_footer
      %s29 = sadd.s32 1, %s25
    $region7: #{tpu_custom_call.1} parent=1 // loop_footer_branch
      %24 = sbr.rel target = $region3
    $region8: #{tpu_custom_call.1} parent=1 // loop_exit
      _
    %1669 = vsyncpa [#allocation9], 1
    %s1670 = scalar_lea.sflag [#allocation9], 1
    %1671 = vsyncpa %s1670, 1
    %1672 = vsyncpa [#allocation12], 1
    %1673 = vsyncpa [#allocation15], 1
    %1674 = vsyncpa [#allocation10], 1
    %s1675 = scalar_lea.sflag [#allocation10], 1
    %1676 = vsyncpa %s1675, 1

</llo_original>
